<compile_context>
chip_gen: v6e
topology: v6e:2x2x1
jax: 0.10.0
libtpu: 0.0.40
codegen_flags: <defaults>
</compile_context>

<pallas_src>
import numpy as np

import jax
import jax.numpy as jnp
from jax.experimental import pallas as pl
from jax.experimental.pallas import tpu as pltpu


# ---------------------------------------------------------------------------
# Instantiated net spec (scaled-down version of the docstring example spec)
# ---------------------------------------------------------------------------
IN_DIM = (4, 16, 16)                                    # (C, H, W), NCHW
CONV_HID_LAYERS = [[8, 3, 2, 0, 1], [16, 3, 1, 0, 1]]   # out_c, k, stride, pad, dil
FC_HID_LAYERS = [32]
OUT_DIM = 6

C0, H0, W0 = IN_DIM
C1, K1, S1, P1, D1 = CONV_HID_LAYERS[0]
C2, K2, S2, P2, D2 = CONV_HID_LAYERS[1]
FC_DIM = FC_HID_LAYERS[0]


def _conv_out(sz, k, s, p, d):
    return (sz + 2 * p - d * (k - 1) - 1) // s + 1


OH1, OW1 = _conv_out(H0, K1, S1, P1, D1), _conv_out(W0, K1, S1, P1, D1)    # 7, 7
OH2, OW2 = _conv_out(OH1, K2, S2, P2, D2), _conv_out(OW1, K2, S2, P2, D2)  # 5, 5


def _round_up(x, m):
    return (x + m - 1) // m * m


# Lane-padded widths of the VMEM-resident activations (padding applied ONCE,
# at init, on the weights -- never per forward; padded columns are exact 0).
N1P = _round_up(OW1 * C1, 128)   # conv1 activation width: 56 -> 128
N2P = _round_up(OW2 * C2, 128)   # conv2 activation width: 80 -> 128
NFP = _round_up(FC_DIM, 128)     # fc activation width:    32 -> 128


# ---------------------------------------------------------------------------
# Fused Pallas kernel: whole ConvNet forward for ONE sample per grid step.
# ---------------------------------------------------------------------------
def _convnet_fused_kernel(x_ref, w1_ref, b1_ref, w2_ref, b2_ref,
                          wfc_ref, bfc_ref, wt_ref, bt_ref, o_ref):
    """x_ref: (2, H0//2, W0*C0) -- NHWC rows of one sample, pre-split into
    even/odd H phases so the stride-2 conv1 only needs contiguous row slices.
    All intermediates live in VMEM/vregs; only the (1, OUT_DIM) tail result is
    written back.
    """
    x_planes = (x_ref[0], x_ref[1])                      # each (H0//2, W0*C0)

    # conv1 + ReLU: stride-2 KxK conv as K shift-and-accumulate row matmuls.
    acc1 = None
    for kh in range(K1):
        rows = x_planes[kh % S1][kh // S1:kh // S1 + OH1, :]   # (OH1, W0*C0)
        t = jnp.dot(rows, w1_ref[kh], preferred_element_type=jnp.float32)
        acc1 = t if acc1 is None else acc1 + t
    act1 = jnp.maximum(acc1 + b1_ref[...], 0.0)          # (OH1, N1P); cols>=56 are 0

    # conv2 + ReLU: stride-1 KxK conv, same decomposition (contiguous slices).
    acc2 = None
    for kh in range(K2):
        t = jnp.dot(act1[kh:kh + OH2, :], w2_ref[kh],
                    preferred_element_type=jnp.float32)
        acc2 = t if acc2 is None else acc2 + t
    act2 = jnp.maximum(acc2 + b2_ref[...], 0.0)          # (OH2, N2P); cols>=80 are 0

    # fc + ReLU: the NCHW flatten is folded into the per-oh weight slices
    # (re-ordered once at init), so it is just OH2 accumulated row matmuls.
    h = bfc_ref[...]                                     # (1, NFP)
    for oh in range(OH2):
        h = h + jnp.dot(act2[oh:oh + 1, :], wfc_ref[oh],
                        preferred_element_type=jnp.float32)
    h = jnp.maximum(h, 0.0)                              # (1, NFP); cols>=32 are 0

    # tail + Tanh.
    out = jnp.tanh(jnp.dot(h, wt_ref[...], preferred_element_type=jnp.float32)
                   + bt_ref[...])                        # (1, OUT_DIM)
    o_ref[...] = out.astype(o_ref.dtype)


# ---------------------------------------------------------------------------
# Parameter init (PyTorch-default-style uniform, deterministic)
# ---------------------------------------------------------------------------
def _uniform(key, shape, fan_in):
    bound = 1.0 / jnp.sqrt(jnp.float32(fan_in))
    return jax.random.uniform(key, shape, jnp.float32, -bound, bound)


def init_convnet_params(key):
    params = {"conv": [], "fc": [], "tail": None}
    in_c = C0
    for out_c, k, stride, pad, dil in CONV_HID_LAYERS:
        key, kw_, kb_ = jax.random.split(key, 3)
        fan_in = in_c * k * k
        w = _uniform(kw_, (out_c, in_c, k, k), fan_in)
        b = _uniform(kb_, (out_c,), fan_in)
        params["conv"].append((w, b, stride, pad, dil))
        in_c = out_c

    conv_out_dim = C2 * OH2 * OW2
    dims = [conv_out_dim] + FC_HID_LAYERS
    for d_in, d_out in zip(dims[:-1], dims[1:]):
        key, kw_, kb_ = jax.random.split(key, 3)
        params["fc"].append((_uniform(kw_, (d_out, d_in), d_in),
                             _uniform(kb_, (d_out,), d_in)))

    key, kw_, kb_ = jax.random.split(key, 3)
    tail_in = FC_HID_LAYERS[-1]
    params["tail"] = (_uniform(kw_, (OUT_DIM, tail_in), tail_in),
                      _uniform(kb_, (OUT_DIM,), tail_in))
    return params


# ---------------------------------------------------------------------------
# One-time (init) conversion of torch-layout params into the pre-unrolled,
# lane-padded layout consumed by the fused kernel.
# ---------------------------------------------------------------------------
def _unroll_conv_rowwise(w, w_in, stride):
    """Unroll each kernel row of a Conv2d (pad=0, dil=1) into a dense matrix.

    w: (Cout, Cin, KH, KW).  Returns (KH, w_in*Cin, OW*Cout) with
      mat[kh, wi*Cin + ci, ow*Cout + co] = w[co, ci, kh, wi - stride*ow]
    (zero outside the receptive field), so that an NHWC activation row slice
    (OH, w_in*Cin) @ mat[kh] gives that kh's contribution in (OH, OW*Cout).
    """
    c_out, c_in, kh_sz, kw_sz = w.shape
    ow_sz = (w_in - kw_sz) // stride + 1
    mat = np.zeros((kh_sz, w_in * c_in, ow_sz * c_out), np.float32)
    for kh in range(kh_sz):
        for ow in range(ow_sz):
            for kw in range(kw_sz):
                wi = ow * stride + kw
                mat[kh, wi * c_in:(wi + 1) * c_in,
                    ow * c_out:(ow + 1) * c_out] = w[:, :, kh, kw].T
    return mat


def prepare_kernel_params(params):
    (w1, b1, s1, p1, d1), (w2, b2, s2, p2, d2) = params["conv"]
    assert (s1, p1, d1) == (2, 0, 1) and (s2, p2, d2) == (1, 0, 1)
    assert H0 % s1 == 0
    wfc, bfc = params["fc"][0]
    wt, bt = params["tail"]

    w1, b1 = np.asarray(w1), np.asarray(b1)
    w2, b2 = np.asarray(w2), np.asarray(b2)
    wfc, bfc = np.asarray(wfc), np.asarray(bfc)
    wt, bt = np.asarray(wt), np.asarray(bt)

    w1k = _unroll_conv_rowwise(w1, W0, s1)     # (K1, W0*C0, OW1*C1)
    w2k = _unroll_conv_rowwise(w2, OW1, s2)    # (K2, OW1*C1, OW2*C2)

    # fc rows reordered from the torch NCHW flatten (c, oh, ow) into the
    # kernel's (oh, ow, c) activation layout, split per oh.
    wfck = wfc.reshape(FC_DIM, C2, OH2, OW2).transpose(2, 3, 1, 0)
    wfck = wfck.reshape(OH2, OW2 * C2, FC_DIM)                     # (5, 80, 32)

    def pad_last(a, to):                       # lane (N) padding with zeros
        return np.pad(a, [(0, 0)] * (a.ndim - 1) + [(0, to - a.shape[-1])])

    def pad_rows(a, to):                       # K (row) padding with zero rows
        return np.pad(a, [(0, 0)] * (a.ndim - 2)
                      + [(0, to - a.shape[-2]), (0, 0)])

    w1k_p = pad_last(w1k, N1P)                                # (K1, 64, 128)
    b1_p = pad_last(np.tile(b1, OW1)[None, :], N1P)           # (1, 128)
    w2k_p = pad_last(pad_rows(w2k, N1P), N2P)                 # (K2, 128, 128)
    b2_p = pad_last(np.tile(b2, OW2)[None, :], N2P)           # (1, 128)
    wfck_p = pad_last(pad_rows(wfck, N2P), NFP)               # (5, 128, 128)
    bfc_p = pad_last(bfc[None, :], NFP)                       # (1, 128)
    wt_p = pad_rows(wt.T, NFP)                                # (128, 6)
    bt_p = bt[None, :]                                        # (1, 6)

    return tuple(jnp.asarray(a, jnp.float32) for a in
                 (w1k_p, b1_p, w2k_p, b2_p, wfck_p, bfc_p, wt_p, bt_p))


# ---------------------------------------------------------------------------
# Forward pass: one fused pallas_call, grid over batch.
# ---------------------------------------------------------------------------
def convnet_forward(kparams, x):
    n = x.shape[0]
    # Input layout prep (only per-forward host op): NCHW -> NHWC rows,
    # split into even/odd H phases for the stride-2 conv1.
    x_rows = jnp.transpose(x, (0, 2, 3, 1)).reshape(n, H0, W0 * C0)
    x_prep = x_rows.reshape(n, H0 // S1, S1, W0 * C0).transpose(0, 2, 1, 3)
    x_prep = x_prep.astype(jnp.float32)                   # (n, 2, H0//2, W0*C0)

    def full_spec(a):
        nd = a.ndim
        return pl.BlockSpec(a.shape, lambda i: (0,) * nd)

    out = pl.pallas_call(
        _convnet_fused_kernel,
        out_shape=jax.ShapeDtypeStruct((n, 1, OUT_DIM), jnp.float32),
        grid=(n,),
        in_specs=[pl.BlockSpec((None, S1, H0 // S1, W0 * C0),
                               lambda i: (i, 0, 0, 0))]
                 + [full_spec(a) for a in kparams],
        out_specs=pl.BlockSpec((None, 1, OUT_DIM), lambda i: (i, 0, 0)),
        compiler_params=pltpu.CompilerParams(
            dimension_semantics=("parallel",)),
    )(x_prep, *kparams)
    return out.reshape(n, OUT_DIM)


convnet_forward_jit = jax.jit(convnet_forward)


# ---------------------------------------------------------------------------
# Pure-JAX reference (correctness check only; uses torch-layout params)
# ---------------------------------------------------------------------------
def convnet_forward_ref(params, x):
    for (w, b, stride, pad, dil) in params["conv"]:
        y = jax.lax.conv_general_dilated(
            x, w, window_strides=(stride, stride),
            padding=[(pad, pad), (pad, pad)],
            rhs_dilation=(dil, dil),
            dimension_numbers=("NCHW", "OIHW", "NCHW"))
        x = jnp.maximum(y + b.reshape(1, -1, 1, 1), 0.0)
    n = x.shape[0]
    x = x.reshape(n, -1)                                  # torch .view(N, -1)
    for (w, b) in params["fc"]:
        x = jnp.maximum(x @ w.T + b, 0.0)
    w, b = params["tail"]
    return jnp.tanh(x @ w.T + b)


if __name__ == "__main__":
    key = jax.random.PRNGKey(0)
    key, pkey, xkey = jax.random.split(key, 3)
    params = init_convnet_params(pkey)
    kparams = prepare_kernel_params(params)   # one-time weight unroll/pad

    batch = 2
    x = jax.random.normal(xkey, (batch,) + IN_DIM, jnp.float32)  # (2, 4, 16, 16)

    out = jax.block_until_ready(convnet_forward_jit(kparams, x))
    ref = jax.block_until_ready(convnet_forward_ref(params, x))

    assert out.shape == (batch, OUT_DIM), out.shape
    assert jnp.allclose(out, ref, rtol=1e-4, atol=1e-4), \
        float(jnp.max(jnp.abs(out - ref)))
    # TODO(synk): BatchNorm2d (training-mode batch stats), normalize (x/255)
    # and multi-head model_tails are not included: the instantiated spec uses
    # batch_norm=False, normalize=False and an integer out_dim.
    print("KERNEL_OK")
</pallas_src>

<mosaic_0001>
module attributes {stable_mosaic.version = 11 : i64} {
  func.func @_convnet_fused_kernel(%arg0: i32, %arg1: memref<1x2x8x64xf32, #tpu.memory_space<vmem>>, %arg2: memref<3x64x128xf32, #tpu.memory_space<vmem>>, %arg3: memref<1x128xf32, #tpu.memory_space<vmem>>, %arg4: memref<3x128x128xf32, #tpu.memory_space<vmem>>, %arg5: memref<1x128xf32, #tpu.memory_space<vmem>>, %arg6: memref<5x128x128xf32, #tpu.memory_space<vmem>>, %arg7: memref<1x128xf32, #tpu.memory_space<vmem>>, %arg8: memref<128x6xf32, #tpu.memory_space<vmem>>, %arg9: memref<1x6xf32, #tpu.memory_space<vmem>>, %arg10: memref<1x1x6xf32, #tpu.memory_space<vmem>>) attributes {dimension_semantics = [#tpu.dimension_semantics<parallel>], iteration_bounds = array<i64: 2>, scalar_prefetch = 0 : i64, scratch_operands = 0 : i64, tpu.core_type = #tpu.core_type<tc>, window_params = [{transform_indices = @transform_0, window_bounds = array<i64: 1, 2, 8, 64>}, {pipeline_mode = #tpu.pipeline_mode<synchronous>, transform_indices = @transform_1, window_bounds = array<i64: 3, 64, 128>}, {pipeline_mode = #tpu.pipeline_mode<synchronous>, transform_indices = @transform_2, window_bounds = array<i64: 1, 128>}, {pipeline_mode = #tpu.pipeline_mode<synchronous>, transform_indices = @transform_3, window_bounds = array<i64: 3, 128, 128>}, {pipeline_mode = #tpu.pipeline_mode<synchronous>, transform_indices = @transform_4, window_bounds = array<i64: 1, 128>}, {pipeline_mode = #tpu.pipeline_mode<synchronous>, transform_indices = @transform_5, window_bounds = array<i64: 5, 128, 128>}, {pipeline_mode = #tpu.pipeline_mode<synchronous>, transform_indices = @transform_6, window_bounds = array<i64: 1, 128>}, {pipeline_mode = #tpu.pipeline_mode<synchronous>, transform_indices = @transform_7, window_bounds = array<i64: 128, 6>}, {pipeline_mode = #tpu.pipeline_mode<synchronous>, transform_indices = @transform_8, window_bounds = array<i64: 1, 6>}, {transform_indices = @transform_9, window_bounds = array<i64: 1, 1, 6>}]} {
    %c0 = arith.constant 0 : index
    %c0_0 = arith.constant 0 : index
    %c0_1 = arith.constant 0 : index
    %c0_2 = arith.constant 0 : index
    %0 = vector.load %arg1[%c0, %c0_0, %c0_1, %c0_2] : memref<1x2x8x64xf32, #tpu.memory_space<vmem>>, vector<1x1x8x64xf32>
    %1 = vector.shape_cast %0 : vector<1x1x8x64xf32> to vector<8x64xf32>
    %c0_3 = arith.constant 0 : index
    %c1 = arith.constant 1 : index
    %c0_4 = arith.constant 0 : index
    %c0_5 = arith.constant 0 : index
    %2 = vector.load %arg1[%c0_3, %c1, %c0_4, %c0_5] : memref<1x2x8x64xf32, #tpu.memory_space<vmem>>, vector<1x1x8x64xf32>
    %3 = vector.shape_cast %2 : vector<1x1x8x64xf32> to vector<8x64xf32>
    %4 = vector.extract_strided_slice %1 {offsets = [0, 0], sizes = [7, 64], strides = [1, 1]} : vector<8x64xf32> to vector<7x64xf32>
    %c0_6 = arith.constant 0 : index
    %c0_7 = arith.constant 0 : index
    %c0_8 = arith.constant 0 : index
    %5 = vector.load %arg2[%c0_6, %c0_7, %c0_8] : memref<3x64x128xf32, #tpu.memory_space<vmem>>, vector<1x64x128xf32>
    %6 = vector.shape_cast %5 : vector<1x64x128xf32> to vector<64x128xf32>
    %cst = arith.constant dense<0.000000e+00> : vector<7x128xf32>
    %7 = tpu.matmul %4, %6, %cst {dimension_numbers = #tpu.dot_dimension_numbers<[1], [0], [0], [1], [0, 0, 1, 1], [], []>} : vector<7x64xf32>, vector<64x128xf32>, vector<7x128xf32> -> vector<7x128xf32>
    %8 = vector.extract_strided_slice %3 {offsets = [0, 0], sizes = [7, 64], strides = [1, 1]} : vector<8x64xf32> to vector<7x64xf32>
    %c1_9 = arith.constant 1 : index
    %c0_10 = arith.constant 0 : index
    %c0_11 = arith.constant 0 : index
    %9 = vector.load %arg2[%c1_9, %c0_10, %c0_11] : memref<3x64x128xf32, #tpu.memory_space<vmem>>, vector<1x64x128xf32>
    %10 = vector.shape_cast %9 : vector<1x64x128xf32> to vector<64x128xf32>
    %cst_12 = arith.constant dense<0.000000e+00> : vector<7x128xf32>
    %11 = tpu.matmul %8, %10, %cst_12 {dimension_numbers = #tpu.dot_dimension_numbers<[1], [0], [0], [1], [0, 0, 1, 1], [], []>} : vector<7x64xf32>, vector<64x128xf32>, vector<7x128xf32> -> vector<7x128xf32>
    %12 = arith.addf %7, %11 : vector<7x128xf32>
    %13 = vector.extract_strided_slice %1 {offsets = [1, 0], sizes = [7, 64], strides = [1, 1]} : vector<8x64xf32> to vector<7x64xf32>
    %c2 = arith.constant 2 : index
    %c0_13 = arith.constant 0 : index
    %c0_14 = arith.constant 0 : index
    %14 = vector.load %arg2[%c2, %c0_13, %c0_14] : memref<3x64x128xf32, #tpu.memory_space<vmem>>, vector<1x64x128xf32>
    %15 = vector.shape_cast %14 : vector<1x64x128xf32> to vector<64x128xf32>
    %cst_15 = arith.constant dense<0.000000e+00> : vector<7x128xf32>
    %16 = tpu.matmul %13, %15, %cst_15 {dimension_numbers = #tpu.dot_dimension_numbers<[1], [0], [0], [1], [0, 0, 1, 1], [], []>} : vector<7x64xf32>, vector<64x128xf32>, vector<7x128xf32> -> vector<7x128xf32>
    %17 = arith.addf %12, %16 : vector<7x128xf32>
    %c0_16 = arith.constant 0 : index
    %c0_17 = arith.constant 0 : index
    %18 = vector.load %arg3[%c0_16, %c0_17] : memref<1x128xf32, #tpu.memory_space<vmem>>, vector<1x128xf32>
    %19 = vector.broadcast %18 : vector<1x128xf32> to vector<7x128xf32>
    %20 = arith.addf %17, %19 : vector<7x128xf32>
    %cst_18 = arith.constant 0.000000e+00 : f32
    %21 = vector.broadcast %cst_18 : f32 to vector<7x128xf32>
    %22 = arith.maximumf %20, %21 : vector<7x128xf32>
    %23 = vector.extract_strided_slice %22 {offsets = [0, 0], sizes = [5, 128], strides = [1, 1]} : vector<7x128xf32> to vector<5x128xf32>
    %c0_19 = arith.constant 0 : index
    %c0_20 = arith.constant 0 : index
    %c0_21 = arith.constant 0 : index
    %24 = vector.load %arg4[%c0_19, %c0_20, %c0_21] : memref<3x128x128xf32, #tpu.memory_space<vmem>>, vector<1x128x128xf32>
    %25 = vector.shape_cast %24 : vector<1x128x128xf32> to vector<128x128xf32>
    %cst_22 = arith.constant dense<0.000000e+00> : vector<5x128xf32>
    %26 = tpu.matmul %23, %25, %cst_22 {dimension_numbers = #tpu.dot_dimension_numbers<[1], [0], [0], [1], [0, 0, 1, 1], [], []>} : vector<5x128xf32>, vector<128x128xf32>, vector<5x128xf32> -> vector<5x128xf32>
    %27 = vector.extract_strided_slice %22 {offsets = [1, 0], sizes = [5, 128], strides = [1, 1]} : vector<7x128xf32> to vector<5x128xf32>
    %c1_23 = arith.constant 1 : index
    %c0_24 = arith.constant 0 : index
    %c0_25 = arith.constant 0 : index
    %28 = vector.load %arg4[%c1_23, %c0_24, %c0_25] : memref<3x128x128xf32, #tpu.memory_space<vmem>>, vector<1x128x128xf32>
    %29 = vector.shape_cast %28 : vector<1x128x128xf32> to vector<128x128xf32>
    %cst_26 = arith.constant dense<0.000000e+00> : vector<5x128xf32>
    %30 = tpu.matmul %27, %29, %cst_26 {dimension_numbers = #tpu.dot_dimension_numbers<[1], [0], [0], [1], [0, 0, 1, 1], [], []>} : vector<5x128xf32>, vector<128x128xf32>, vector<5x128xf32> -> vector<5x128xf32>
    %31 = arith.addf %26, %30 : vector<5x128xf32>
    %32 = vector.extract_strided_slice %22 {offsets = [2, 0], sizes = [5, 128], strides = [1, 1]} : vector<7x128xf32> to vector<5x128xf32>
    %c2_27 = arith.constant 2 : index
    %c0_28 = arith.constant 0 : index
    %c0_29 = arith.constant 0 : index
    %33 = vector.load %arg4[%c2_27, %c0_28, %c0_29] : memref<3x128x128xf32, #tpu.memory_space<vmem>>, vector<1x128x128xf32>
    %34 = vector.shape_cast %33 : vector<1x128x128xf32> to vector<128x128xf32>
    %cst_30 = arith.constant dense<0.000000e+00> : vector<5x128xf32>
    %35 = tpu.matmul %32, %34, %cst_30 {dimension_numbers = #tpu.dot_dimension_numbers<[1], [0], [0], [1], [0, 0, 1, 1], [], []>} : vector<5x128xf32>, vector<128x128xf32>, vector<5x128xf32> -> vector<5x128xf32>
    %36 = arith.addf %31, %35 : vector<5x128xf32>
    %c0_31 = arith.constant 0 : index
    %c0_32 = arith.constant 0 : index
    %37 = vector.load %arg5[%c0_31, %c0_32] : memref<1x128xf32, #tpu.memory_space<vmem>>, vector<1x128xf32>
    %38 = vector.broadcast %37 : vector<1x128xf32> to vector<5x128xf32>
    %39 = arith.addf %36, %38 : vector<5x128xf32>
    %cst_33 = arith.constant 0.000000e+00 : f32
    %40 = vector.broadcast %cst_33 : f32 to vector<5x128xf32>
    %41 = arith.maximumf %39, %40 : vector<5x128xf32>
    %c0_34 = arith.constant 0 : index
    %c0_35 = arith.constant 0 : index
    %42 = vector.load %arg7[%c0_34, %c0_35] : memref<1x128xf32, #tpu.memory_space<vmem>>, vector<1x128xf32>
    %43 = vector.extract_strided_slice %41 {offsets = [0, 0], sizes = [1, 128], strides = [1, 1]} : vector<5x128xf32> to vector<1x128xf32>
    %c0_36 = arith.constant 0 : index
    %c0_37 = arith.constant 0 : index
    %c0_38 = arith.constant 0 : index
    %44 = vector.load %arg6[%c0_36, %c0_37, %c0_38] : memref<5x128x128xf32, #tpu.memory_space<vmem>>, vector<1x128x128xf32>
    %45 = vector.shape_cast %44 : vector<1x128x128xf32> to vector<128x128xf32>
    %cst_39 = arith.constant dense<0.000000e+00> : vector<1x128xf32>
    %46 = tpu.matmul %43, %45, %cst_39 {dimension_numbers = #tpu.dot_dimension_numbers<[1], [0], [0], [1], [0, 0, 1, 1], [], []>} : vector<1x128xf32>, vector<128x128xf32>, vector<1x128xf32> -> vector<1x128xf32>
    %47 = arith.addf %42, %46 : vector<1x128xf32>
    %48 = vector.extract_strided_slice %41 {offsets = [1, 0], sizes = [1, 128], strides = [1, 1]} : vector<5x128xf32> to vector<1x128xf32>
    %c1_40 = arith.constant 1 : index
    %c0_41 = arith.constant 0 : index
    %c0_42 = arith.constant 0 : index
    %49 = vector.load %arg6[%c1_40, %c0_41, %c0_42] : memref<5x128x128xf32, #tpu.memory_space<vmem>>, vector<1x128x128xf32>
    %50 = vector.shape_cast %49 : vector<1x128x128xf32> to vector<128x128xf32>
    %cst_43 = arith.constant dense<0.000000e+00> : vector<1x128xf32>
    %51 = tpu.matmul %48, %50, %cst_43 {dimension_numbers = #tpu.dot_dimension_numbers<[1], [0], [0], [1], [0, 0, 1, 1], [], []>} : vector<1x128xf32>, vector<128x128xf32>, vector<1x128xf32> -> vector<1x128xf32>
    %52 = arith.addf %47, %51 : vector<1x128xf32>
    %53 = vector.extract_strided_slice %41 {offsets = [2, 0], sizes = [1, 128], strides = [1, 1]} : vector<5x128xf32> to vector<1x128xf32>
    %c2_44 = arith.constant 2 : index
    %c0_45 = arith.constant 0 : index
    %c0_46 = arith.constant 0 : index
    %54 = vector.load %arg6[%c2_44, %c0_45, %c0_46] : memref<5x128x128xf32, #tpu.memory_space<vmem>>, vector<1x128x128xf32>
    %55 = vector.shape_cast %54 : vector<1x128x128xf32> to vector<128x128xf32>
    %cst_47 = arith.constant dense<0.000000e+00> : vector<1x128xf32>
    %56 = tpu.matmul %53, %55, %cst_47 {dimension_numbers = #tpu.dot_dimension_numbers<[1], [0], [0], [1], [0, 0, 1, 1], [], []>} : vector<1x128xf32>, vector<128x128xf32>, vector<1x128xf32> -> vector<1x128xf32>
    %57 = arith.addf %52, %56 : vector<1x128xf32>
    %58 = vector.extract_strided_slice %41 {offsets = [3, 0], sizes = [1, 128], strides = [1, 1]} : vector<5x128xf32> to vector<1x128xf32>
    %c3 = arith.constant 3 : index
    %c0_48 = arith.constant 0 : index
    %c0_49 = arith.constant 0 : index
    %59 = vector.load %arg6[%c3, %c0_48, %c0_49] : memref<5x128x128xf32, #tpu.memory_space<vmem>>, vector<1x128x128xf32>
    %60 = vector.shape_cast %59 : vector<1x128x128xf32> to vector<128x128xf32>
    %cst_50 = arith.constant dense<0.000000e+00> : vector<1x128xf32>
    %61 = tpu.matmul %58, %60, %cst_50 {dimension_numbers = #tpu.dot_dimension_numbers<[1], [0], [0], [1], [0, 0, 1, 1], [], []>} : vector<1x128xf32>, vector<128x128xf32>, vector<1x128xf32> -> vector<1x128xf32>
    %62 = arith.addf %57, %61 : vector<1x128xf32>
    %63 = vector.extract_strided_slice %41 {offsets = [4, 0], sizes = [1, 128], strides = [1, 1]} : vector<5x128xf32> to vector<1x128xf32>
    %c4 = arith.constant 4 : index
    %c0_51 = arith.constant 0 : index
    %c0_52 = arith.constant 0 : index
    %64 = vector.load %arg6[%c4, %c0_51, %c0_52] : memref<5x128x128xf32, #tpu.memory_space<vmem>>, vector<1x128x128xf32>
    %65 = vector.shape_cast %64 : vector<1x128x128xf32> to vector<128x128xf32>
    %cst_53 = arith.constant dense<0.000000e+00> : vector<1x128xf32>
    %66 = tpu.matmul %63, %65, %cst_53 {dimension_numbers = #tpu.dot_dimension_numbers<[1], [0], [0], [1], [0, 0, 1, 1], [], []>} : vector<1x128xf32>, vector<128x128xf32>, vector<1x128xf32> -> vector<1x128xf32>
    %67 = arith.addf %62, %66 : vector<1x128xf32>
    %cst_54 = arith.constant 0.000000e+00 : f32
    %68 = vector.broadcast %cst_54 : f32 to vector<1x128xf32>
    %69 = arith.maximumf %67, %68 : vector<1x128xf32>
    %c0_55 = arith.constant 0 : index
    %c0_56 = arith.constant 0 : index
    %70 = vector.load %arg8[%c0_55, %c0_56] : memref<128x6xf32, #tpu.memory_space<vmem>>, vector<128x6xf32>
    %cst_57 = arith.constant dense<0.000000e+00> : vector<1x6xf32>
    %71 = tpu.matmul %69, %70, %cst_57 {dimension_numbers = #tpu.dot_dimension_numbers<[1], [0], [0], [1], [0, 0, 1, 1], [], []>} : vector<1x128xf32>, vector<128x6xf32>, vector<1x6xf32> -> vector<1x6xf32>
    %c0_58 = arith.constant 0 : index
    %c0_59 = arith.constant 0 : index
    %72 = vector.load %arg9[%c0_58, %c0_59] : memref<1x6xf32, #tpu.memory_space<vmem>>, vector<1x6xf32>
    %73 = arith.addf %71, %72 : vector<1x6xf32>
    %74 = math.tanh %73 : vector<1x6xf32>
    %c0_60 = arith.constant 0 : index
    %c0_61 = arith.constant 0 : index
    %c0_62 = arith.constant 0 : index
    %75 = vector.load %arg10[%c0_60, %c0_61, %c0_62] : memref<1x1x6xf32, #tpu.memory_space<vmem>>, vector<1x1x6xf32>
    %76 = vector.shape_cast %75 : vector<1x1x6xf32> to vector<1x6xf32>
    %77 = vector.shape_cast %74 : vector<1x6xf32> to vector<1x1x6xf32>
    tpu.vector_store %arg10[%c0_60, %c0_61, %c0_62], %77 {strides = array<i32>} : memref<1x1x6xf32, #tpu.memory_space<vmem>>, vector<1x1x6xf32>,
    return
  }
  func.func @transform_0(%arg0: i32) -> (i32, i32, i32, i32) {
    %c0_i32 = arith.constant 0 : i32
    %c0_i32_0 = arith.constant 0 : i32
    %c0_i32_1 = arith.constant 0 : i32
    %c0_i32_2 = arith.constant 0 : i32
    return %arg0, %c0_i32, %c0_i32_0, %c0_i32_1 : i32, i32, i32, i32
  }
  func.func @transform_1(%arg0: i32) -> (i32, i32, i32) {
    %c0_i32 = arith.constant 0 : i32
    %c0_i32_0 = arith.constant 0 : i32
    %c0_i32_1 = arith.constant 0 : i32
    %c0_i32_2 = arith.constant 0 : i32
    return %c0_i32, %c0_i32_0, %c0_i32_1 : i32, i32, i32
  }
  func.func @transform_2(%arg0: i32) -> (i32, i32) {
    %c0_i32 = arith.constant 0 : i32
    %c0_i32_0 = arith.constant 0 : i32
    %c0_i32_1 = arith.constant 0 : i32
    return %c0_i32, %c0_i32_0 : i32, i32
  }
  func.func @transform_3(%arg0: i32) -> (i32, i32, i32) {
    %c0_i32 = arith.constant 0 : i32
    %c0_i32_0 = arith.constant 0 : i32
    %c0_i32_1 = arith.constant 0 : i32
    %c0_i32_2 = arith.constant 0 : i32
    return %c0_i32, %c0_i32_0, %c0_i32_1 : i32, i32, i32
  }
  func.func @transform_4(%arg0: i32) -> (i32, i32) {
    %c0_i32 = arith.constant 0 : i32
    %c0_i32_0 = arith.constant 0 : i32
    %c0_i32_1 = arith.constant 0 : i32
    return %c0_i32, %c0_i32_0 : i32, i32
  }
  func.func @transform_5(%arg0: i32) -> (i32, i32, i32) {
    %c0_i32 = arith.constant 0 : i32
    %c0_i32_0 = arith.constant 0 : i32
    %c0_i32_1 = arith.constant 0 : i32
    %c0_i32_2 = arith.constant 0 : i32
    return %c0_i32, %c0_i32_0, %c0_i32_1 : i32, i32, i32
  }
  func.func @transform_6(%arg0: i32) -> (i32, i32) {
    %c0_i32 = arith.constant 0 : i32
    %c0_i32_0 = arith.constant 0 : i32
    %c0_i32_1 = arith.constant 0 : i32
    return %c0_i32, %c0_i32_0 : i32, i32
  }
  func.func @transform_7(%arg0: i32) -> (i32, i32) {
    %c0_i32 = arith.constant 0 : i32
    %c0_i32_0 = arith.constant 0 : i32
    %c0_i32_1 = arith.constant 0 : i32
    return %c0_i32, %c0_i32_0 : i32, i32
  }
  func.func @transform_8(%arg0: i32) -> (i32, i32) {
    %c0_i32 = arith.constant 0 : i32
    %c0_i32_0 = arith.constant 0 : i32
    %c0_i32_1 = arith.constant 0 : i32
    return %c0_i32, %c0_i32_0 : i32, i32
  }
  func.func @transform_9(%arg0: i32) -> (i32, i32, i32) {
    %c0_i32 = arith.constant 0 : i32
    %c0_i32_0 = arith.constant 0 : i32
    %c0_i32_1 = arith.constant 0 : i32
    return %arg0, %c0_i32, %c0_i32_0 : i32, i32, i32
  }
}

</mosaic_0001>

<llo_original>
// kernel: convnet_forward.1
$region0: #{convnet_forward.1}
  #allocation0 [shape = 'u32[]', space=smem, size = 0x4, offset = 0x4, fixed_abs, tag = 'smem constant byte address 0x4 - core index']
  #allocation1 [shape = 'u32[144,128]{1,0:T(1,128)}', space=vmem, size = 0x12000, scoped, tag = 'internal scratch']
  %s0 = inlined_call_operand.vmem [shape: f32[2,2,8,64], index: 0, kind: input, shape index: {}]
  %s1 = inlined_call_operand.vmem [shape: f32[3,64,128], index: 1, kind: input, shape index: {}]
  %s2 = inlined_call_operand.vmem [shape: f32[1,128], index: 2, kind: input, shape index: {}]
  %s3 = inlined_call_operand.vmem [shape: f32[3,128,128], index: 3, kind: input, shape index: {}]
  %s4 = inlined_call_operand.vmem [shape: f32[1,128], index: 4, kind: input, shape index: {}]
  %s5 = inlined_call_operand.vmem [shape: f32[5,128,128], index: 5, kind: input, shape index: {}]
  %s6 = inlined_call_operand.vmem [shape: f32[1,128], index: 6, kind: input, shape index: {}]
  %s7 = inlined_call_operand.vmem [shape: f32[128,6], index: 7, kind: input, shape index: {}]
  %s8 = inlined_call_operand.vmem [shape: f32[1,6], index: 8, kind: input, shape index: {}]
  %s9 = inlined_call_operand.hbm [shape: f32[2,1,6], index: 9, kind: output, shape index: {}]
  %s10 = sld [smem:[#allocation0]]
  $region69: #{convnet_forward.1} parent=0
    _
  %s12 = ssub.s32 1, %s10
  %s13 = scalar_select 0, %s12, %s10
  $region1: #{convnet_forward.1} parent=0
    #allocation2 [shape = 'u8[1024]{0}', space=vmem, size = 0x400, scoped, tag = 'output window, operand 0']
    #allocation3 [shape = 's32[2]{0}', space=sflag, size = 0x8, scoped, tag = 'scoped memory for convnet_forward.1']
    %14 = vsyncpa [#allocation3], 0
    %s15 = scalar_lea.sflag [#allocation3], 1
    %16 = vsyncpa %s15, 0
    loop: start=0, step=1, limit=4
    $region2: #{convnet_forward.1} parent=1 // loop_pre_header
      _
    $region3: #{convnet_forward.1} parent=1 // loop_header
      %s18 = sphi 0, %s22
      %p19 = scmp.ge.s32.totalorder %s18, 4
      %s28 = sphi 0, %s30
      %s31 = sphi 0, %s28
      %s32 = sphi 0, %s31
      %s48 = sphi 0, %s32
      %s52 = sphi 0, %s52
      %s54 = sphi 0, %s52
      %s55 = sphi 0, %s54
      %s69 = sphi 0, %s55
      %s73 = sphi 0, %s73
      %s75 = sphi 0, %s73
      %s76 = sphi 0, %s75
      %s90 = sphi 0, %s76
      %s94 = sphi 0, %s94
      %s96 = sphi 0, %s94
      %s97 = sphi 0, %s96
      %s111 = sphi 0, %s97
      %s115 = sphi 0, %s115
      %s117 = sphi 0, %s115
      %s118 = sphi 0, %s117
      %s132 = sphi 0, %s118
      %s136 = sphi 0, %s136
      %s138 = sphi 0, %s136
      %s139 = sphi 0, %s138
      %s153 = sphi 0, %s139
      %s157 = sphi 0, %s157
      %s159 = sphi 0, %s157
      %s160 = sphi 0, %s159
      %s174 = sphi 0, %s160
      %s178 = sphi 0, %s178
      %s180 = sphi 0, %s178
      %s181 = sphi 0, %s180
      %s195 = sphi 0, %s181
      %s199 = sphi 0, %s199
      %s201 = sphi 0, %s199
      %s202 = sphi 0, %s201
      %s216 = sphi 0, %s202
      %s222 = sphi 0, %s224
      %s225 = sphi 0, %s222
      %s226 = sphi 0, %s225
      %s242 = sphi 0, %s226
    $region4: #{convnet_forward.1} parent=1 // loop_header_branch
      %21 = sbr.rel (%p19) target = $region8
    $region5: #{convnet_forward.1} parent=1 // loop_body
      %s23 = ssub.s32 %s18, 1
      %s24 = ssub.s32 %s18, 2
      %s25 = sadd.s32 %s18, 1
      %s26 = ssub.s32 %s18, %s25
      %p27 = scmp.eq.s32.totalorder %s26, 0
      %s29 = sadd.s32 %s28, 1
      %s30 = scalar_select %p27, %s28, %s29
      %p33 = pneg %p27
      %p34 = scmp.eq.s32.totalorder %s18, 1
      %p35 = por %p33, %p34
      %p36 = scmp.ne.s32.totalorder %s28, %s31
      %p37 = scmp.eq.s32.totalorder %s18, 0
      %p38 = por %p36, %p37
      %p39 = scmp.ne.s32.totalorder %s28, %s31
      %p40 = scmp.eq.s32.totalorder %s23, 1
      %p41 = por %p39, %p40
      %p42 = scmp.ne.s32.totalorder %s31, %s32
      %p43 = scmp.eq.s32.totalorder %s23, 0
      %p44 = por %p42, %p43
      %p45 = scmp.ne.s32.totalorder %s31, %s32
      %p46 = scmp.eq.s32.totalorder %s24, 1
      %p47 = por %p45, %p46
      %p49 = scmp.ne.s32.totalorder %s32, %s48
      %p50 = scmp.eq.s32.totalorder %s24, 0
      %p51 = por %p49, %p50
      %s53 = sadd.s32 %s52, 1
      %p56 = scmp.eq.s32.totalorder %s18, 1
      %p57 = scmp.ne.s32.totalorder %s52, %s54
      %p58 = scmp.eq.s32.totalorder %s18, 0
      %p59 = por %p57, %p58
      %p60 = scmp.ne.s32.totalorder %s52, %s54
      %p61 = scmp.eq.s32.totalorder %s23, 1
      %p62 = por %p60, %p61
      %p63 = scmp.ne.s32.totalorder %s54, %s55
      %p64 = scmp.eq.s32.totalorder %s23, 0
      %p65 = por %p63, %p64
      %p66 = scmp.ne.s32.totalorder %s54, %s55
      %p67 = scmp.eq.s32.totalorder %s24, 1
      %p68 = por %p66, %p67
      %p70 = scmp.ne.s32.totalorder %s55, %s69
      %p71 = scmp.eq.s32.totalorder %s24, 0
      %p72 = por %p70, %p71
      %s74 = sadd.s32 %s73, 1
      %p77 = scmp.eq.s32.totalorder %s18, 1
      %p78 = scmp.ne.s32.totalorder %s73, %s75
      %p79 = scmp.eq.s32.totalorder %s18, 0
      %p80 = por %p78, %p79
      %p81 = scmp.ne.s32.totalorder %s73, %s75
      %p82 = scmp.eq.s32.totalorder %s23, 1
      %p83 = por %p81, %p82
      %p84 = scmp.ne.s32.totalorder %s75, %s76
      %p85 = scmp.eq.s32.totalorder %s23, 0
      %p86 = por %p84, %p85
      %p87 = scmp.ne.s32.totalorder %s75, %s76
      %p88 = scmp.eq.s32.totalorder %s24, 1
      %p89 = por %p87, %p88
      %p91 = scmp.ne.s32.totalorder %s76, %s90
      %p92 = scmp.eq.s32.totalorder %s24, 0
      %p93 = por %p91, %p92
      %s95 = sadd.s32 %s94, 1
      %p98 = scmp.eq.s32.totalorder %s18, 1
      %p99 = scmp.ne.s32.totalorder %s94, %s96
      %p100 = scmp.eq.s32.totalorder %s18, 0
      %p101 = por %p99, %p100
      %p102 = scmp.ne.s32.totalorder %s94, %s96
      %p103 = scmp.eq.s32.totalorder %s23, 1
      %p104 = por %p102, %p103
      %p105 = scmp.ne.s32.totalorder %s96, %s97
      %p106 = scmp.eq.s32.totalorder %s23, 0
      %p107 = por %p105, %p106
      %p108 = scmp.ne.s32.totalorder %s96, %s97
      %p109 = scmp.eq.s32.totalorder %s24, 1
      %p110 = por %p108, %p109
      %p112 = scmp.ne.s32.totalorder %s97, %s111
      %p113 = scmp.eq.s32.totalorder %s24, 0
      %p114 = por %p112, %p113
      %s116 = sadd.s32 %s115, 1
      %p119 = scmp.eq.s32.totalorder %s18, 1
      %p120 = scmp.ne.s32.totalorder %s115, %s117
      %p121 = scmp.eq.s32.totalorder %s18, 0
      %p122 = por %p120, %p121
      %p123 = scmp.ne.s32.totalorder %s115, %s117
      %p124 = scmp.eq.s32.totalorder %s23, 1
      %p125 = por %p123, %p124
      %p126 = scmp.ne.s32.totalorder %s117, %s118
      %p127 = scmp.eq.s32.totalorder %s23, 0
      %p128 = por %p126, %p127
      %p129 = scmp.ne.s32.totalorder %s117, %s118
      %p130 = scmp.eq.s32.totalorder %s24, 1
      %p131 = por %p129, %p130
      %p133 = scmp.ne.s32.totalorder %s118, %s132
      %p134 = scmp.eq.s32.totalorder %s24, 0
      %p135 = por %p133, %p134
      %s137 = sadd.s32 %s136, 1
      %p140 = scmp.eq.s32.totalorder %s18, 1
      %p141 = scmp.ne.s32.totalorder %s136, %s138
      %p142 = scmp.eq.s32.totalorder %s18, 0
      %p143 = por %p141, %p142
      %p144 = scmp.ne.s32.totalorder %s136, %s138
      %p145 = scmp.eq.s32.totalorder %s23, 1
      %p146 = por %p144, %p145
      %p147 = scmp.ne.s32.totalorder %s138, %s139
      %p148 = scmp.eq.s32.totalorder %s23, 0
      %p149 = por %p147, %p148
      %p150 = scmp.ne.s32.totalorder %s138, %s139
      %p151 = scmp.eq.s32.totalorder %s24, 1
      %p152 = por %p150, %p151
      %p154 = scmp.ne.s32.totalorder %s139, %s153
      %p155 = scmp.eq.s32.totalorder %s24, 0
      %p156 = por %p154, %p155
      %s158 = sadd.s32 %s157, 1
      %p161 = scmp.eq.s32.totalorder %s18, 1
      %p162 = scmp.ne.s32.totalorder %s157, %s159
      %p163 = scmp.eq.s32.totalorder %s18, 0
      %p164 = por %p162, %p163
      %p165 = scmp.ne.s32.totalorder %s157, %s159
      %p166 = scmp.eq.s32.totalorder %s23, 1
      %p167 = por %p165, %p166
      %p168 = scmp.ne.s32.totalorder %s159, %s160
      %p169 = scmp.eq.s32.totalorder %s23, 0
      %p170 = por %p168, %p169
      %p171 = scmp.ne.s32.totalorder %s159, %s160
      %p172 = scmp.eq.s32.totalorder %s24, 1
      %p173 = por %p171, %p172
      %p175 = scmp.ne.s32.totalorder %s160, %s174
      %p176 = scmp.eq.s32.totalorder %s24, 0
      %p177 = por %p175, %p176
      %s179 = sadd.s32 %s178, 1
      %p182 = scmp.eq.s32.totalorder %s18, 1
      %p183 = scmp.ne.s32.totalorder %s178, %s180
      %p184 = scmp.eq.s32.totalorder %s18, 0
      %p185 = por %p183, %p184
      %p186 = scmp.ne.s32.totalorder %s178, %s180
      %p187 = scmp.eq.s32.totalorder %s23, 1
      %p188 = por %p186, %p187
      %p189 = scmp.ne.s32.totalorder %s180, %s181
      %p190 = scmp.eq.s32.totalorder %s23, 0
      %p191 = por %p189, %p190
      %p192 = scmp.ne.s32.totalorder %s180, %s181
      %p193 = scmp.eq.s32.totalorder %s24, 1
      %p194 = por %p192, %p193
      %p196 = scmp.ne.s32.totalorder %s181, %s195
      %p197 = scmp.eq.s32.totalorder %s24, 0
      %p198 = por %p196, %p197
      %s200 = sadd.s32 %s199, 1
      %p203 = scmp.eq.s32.totalorder %s18, 1
      %p204 = scmp.ne.s32.totalorder %s199, %s201
      %p205 = scmp.eq.s32.totalorder %s18, 0
      %p206 = por %p204, %p205
      %p207 = scmp.ne.s32.totalorder %s199, %s201
      %p208 = scmp.eq.s32.totalorder %s23, 1
      %p209 = por %p207, %p208
      %p210 = scmp.ne.s32.totalorder %s201, %s202
      %p211 = scmp.eq.s32.totalorder %s23, 0
      %p212 = por %p210, %p211
      %p213 = scmp.ne.s32.totalorder %s201, %s202
      %p214 = scmp.eq.s32.totalorder %s24, 1
      %p215 = por %p213, %p214
      %p217 = scmp.ne.s32.totalorder %s202, %s216
      %p218 = scmp.eq.s32.totalorder %s24, 0
      %p219 = por %p217, %p218
      %s220 = ssub.s32 %s18, %s25
      %p221 = scmp.eq.s32.totalorder %s220, 0
      %s223 = sadd.s32 %s222, 1
      %s224 = scalar_select %p221, %s222, %s223
      %p227 = pneg %p221
      %p228 = scmp.eq.s32.totalorder %s18, 1
      %p229 = por %p227, %p228
      %p230 = scmp.ne.s32.totalorder %s222, %s225
      %p231 = scmp.eq.s32.totalorder %s18, 0
      %p232 = por %p230, %p231
      %p233 = scmp.ne.s32.totalorder %s222, %s225
      %p234 = scmp.eq.s32.totalorder %s23, 1
      %p235 = por %p233, %p234
      %p236 = scmp.ne.s32.totalorder %s225, %s226
      %p237 = scmp.eq.s32.totalorder %s23, 0
      %p238 = por %p236, %p237
      %p239 = scmp.ne.s32.totalorder %s225, %s226
      %p240 = scmp.eq.s32.totalorder %s24, 1
      %p241 = por %p239, %p240
      %p243 = scmp.ne.s32.totalorder %s226, %s242
      %p244 = scmp.eq.s32.totalorder %s24, 0
      %p245 = por %p243, %p244
      %p246 = scmp.le.s32.totalorder 1, %s18
      %p247 = scmp.lt.s32.totalorder %s18, 3
      %p248 = pnand %p246, %p247
      %p249 = pneg %p248
      // Predicated region
      $region9: #{convnet_forward.1} parent=5 // pred_check
        _
      $region10: #{convnet_forward.1} parent=5 // pred_check_branch
        %251 = sbr.rel (%p248) target = $region12
      $region11: #{convnet_forward.1} parent=5 // pred_region
        %s252 = ssub.s32 %s18, 1
        // Predicated region
        $region13: #{convnet_forward.1} parent=11 // pred_check
          %p253 = pneg %p65
        $region14: #{convnet_forward.1} parent=11 // pred_check_branch
          %255 = sbr.rel (%p253) target = $region16
        $region15: #{convnet_forward.1} parent=11 // pred_region
          _
        $region16: #{convnet_forward.1} parent=11 // pred_fallthru
          _
        // Predicated region
        $region17: #{convnet_forward.1} parent=11 // pred_check
          %p256 = pneg %p86
        $region18: #{convnet_forward.1} parent=11 // pred_check_branch
          %258 = sbr.rel (%p256) target = $region20
        $region19: #{convnet_forward.1} parent=11 // pred_region
          _
        $region20: #{convnet_forward.1} parent=11 // pred_fallthru
          _
        // Predicated region
        $region21: #{convnet_forward.1} parent=11 // pred_check
          %p259 = pneg %p107
        $region22: #{convnet_forward.1} parent=11 // pred_check_branch
          %261 = sbr.rel (%p259) target = $region24
        $region23: #{convnet_forward.1} parent=11 // pred_region
          _
        $region24: #{convnet_forward.1} parent=11 // pred_fallthru
          _
        // Predicated region
        $region25: #{convnet_forward.1} parent=11 // pred_check
          %p262 = pneg %p128
        $region26: #{convnet_forward.1} parent=11 // pred_check_branch
          %264 = sbr.rel (%p262) target = $region28
        $region27: #{convnet_forward.1} parent=11 // pred_region
          _
        $region28: #{convnet_forward.1} parent=11 // pred_fallthru
          _
        // Predicated region
        $region29: #{convnet_forward.1} parent=11 // pred_check
          %p265 = pneg %p149
        $region30: #{convnet_forward.1} parent=11 // pred_check_branch
          %267 = sbr.rel (%p265) target = $region32
        $region31: #{convnet_forward.1} parent=11 // pred_region
          _
        $region32: #{convnet_forward.1} parent=11 // pred_fallthru
          _
        // Predicated region
        $region33: #{convnet_forward.1} parent=11 // pred_check
          %p268 = pneg %p170
        $region34: #{convnet_forward.1} parent=11 // pred_check_branch
          %270 = sbr.rel (%p268) target = $region36
        $region35: #{convnet_forward.1} parent=11 // pred_region
          _
        $region36: #{convnet_forward.1} parent=11 // pred_fallthru
          _
        // Predicated region
        $region37: #{convnet_forward.1} parent=11 // pred_check
          %p271 = pneg %p191
        $region38: #{convnet_forward.1} parent=11 // pred_check_branch
          %273 = sbr.rel (%p271) target = $region40
        $region39: #{convnet_forward.1} parent=11 // pred_region
          _
        $region40: #{convnet_forward.1} parent=11 // pred_fallthru
          _
        // Predicated region
        $region41: #{convnet_forward.1} parent=11 // pred_check
          %p274 = pneg %p212
        $region42: #{convnet_forward.1} parent=11 // pred_check_branch
          %276 = sbr.rel (%p274) target = $region44
        $region43: #{convnet_forward.1} parent=11 // pred_region
          _
        $region44: #{convnet_forward.1} parent=11 // pred_fallthru
          _
      $region12: #{convnet_forward.1} parent=5 // pred_fallthru
        _
      %p277 = scmp.lt.s32.totalorder %s18, 2
      // Predicated region
      $region45: #{convnet_forward.1} parent=5 // pred_check
        %p278 = pneg %p277
      $region46: #{convnet_forward.1} parent=5 // pred_check_branch
        %280 = sbr.rel (%p278) target = $region48
      $region47: #{convnet_forward.1} parent=5 // pred_region
        // Predicated region
        $region49: #{convnet_forward.1} parent=47 // pred_check
          %p281 = pneg %p38
        $region50: #{convnet_forward.1} parent=47 // pred_check_branch
          %283 = sbr.rel (%p281) target = $region52
        $region51: #{convnet_forward.1} parent=47 // pred_region
          %p284 = scmp.lt.s32.totalorder %s18, 1
          %s285 = scalar_select %p284, %s18, 1
          %s286 = smul.addr %s285, 2
          %s287 = smul.addr %s286, 8
          %s288 = scalar_lea.vmem %s0, %s287
        $region52: #{convnet_forward.1} parent=47 // pred_fallthru
          _
      $region48: #{convnet_forward.1} parent=5 // pred_fallthru
        _
      %p289 = scmp.le.s32.totalorder 1, %s18
      %p290 = scmp.lt.s32.totalorder %s18, 3
      %p291 = pnand %p289, %p290
      %p292 = pneg %p291
      // Predicated region
      $region53: #{convnet_forward.1} parent=5 // pred_check
        _
      $region54: #{convnet_forward.1} parent=5 // pred_check_branch
        %294 = sbr.rel (%p291) target = $region56
      $region55: #{convnet_forward.1} parent=5 // pred_region
        %s295 = ssub.s32 %s18, 1
        %p296 = scmp.lt.s32.totalorder %s23, 1
        %s297 = scalar_select %p296, %s23, 1
        %s298 = smul.addr %s297, 2
        %s299 = smul.addr %s298, 8
        %s300 = scalar_lea.vmem %s0, %s299
        %p301 = pneg %p44
        %p302 = pneg %p41
        %p303 = pneg %p65
        %p304 = pneg %p62
        %p305 = pneg %p86
        %p306 = pneg %p83
        %p307 = pneg %p107
        %p308 = pneg %p104
        %p309 = pneg %p128
        %p310 = pneg %p125
        %p311 = pneg %p149
        %p312 = pneg %p146
        %p313 = pneg %p170
        %p314 = pneg %p167
        %p315 = pneg %p191
        %p316 = pneg %p188
        %p317 = pneg %p212
        %p318 = pneg %p209
        %p319 = pneg %p238
        %p320 = pneg %p235
        %s321 = sand.u32 %s225, 1
        %s322 = scalar_lea.sflag [#allocation3], %s321
        %s323 = sand.u32 %s225, 1
        %s324 = scalar_lea.vmem [#allocation2], %s323
        %p325 = scmp.lt.s32.totalorder %s23, 1
        %s326 = scalar_select %p325, %s23, 1
        %s327 = smul.addr %s326, 2
        %s328 = smul.addr %s327, 8
        %s329 = scalar_lea.vmem %s0, %s328
        %v330 = vld [vmem:[%s329] sm:$0xff]
        %s331 = scalar_lea.vmem %s329, 8
        %v332 = vld [vmem:[%s331] sm:$0xff]
        %v333 = vld [vmem:[%s1] sm:$0xff]
        %v334 = vld [vmem:[%s1 + $0x8] sm:$0xff]
        %v335 = vld [vmem:[%s1 + $0x10] sm:$0xff]
        %v336 = vld [vmem:[%s1 + $0x18] sm:$0xff]
        %v337 = vld [vmem:[%s1 + $0x20] sm:$0xff]
        %v338 = vld [vmem:[%s1 + $0x28] sm:$0xff]
        %v339 = vld [vmem:[%s1 + $0x30] sm:$0xff]
        %v340 = vld [vmem:[%s1 + $0x38] sm:$0xff]
        %s341 = scalar_lea.vmem %s1, 64
        %v342 = vld [vmem:[%s341] sm:$0xff]
        %v343 = vld [vmem:[%s341 + $0x8] sm:$0xff]
        %v344 = vld [vmem:[%s341 + $0x10] sm:$0xff]
        %v345 = vld [vmem:[%s341 + $0x18] sm:$0xff]
        %v346 = vld [vmem:[%s341 + $0x20] sm:$0xff]
        %v347 = vld [vmem:[%s341 + $0x28] sm:$0xff]
        %v348 = vld [vmem:[%s341 + $0x30] sm:$0xff]
        %v349 = vld [vmem:[%s341 + $0x38] sm:$0xff]
        %vm350 = vcmask 523264
        %v352 = vsel %vm350, %v332, 0
        %354 = vmatprep.subr.mxu0 0.0
        %355 = vmatpush1.msra.mxu0 0.0
        %356 = vmatprep.subr.mxu0 0.0
        %357 = vmatpush1.msra.mxu0 0.0
        %358 = vmatprep.subr.mxu0 0.0
        %359 = vmatpush1.msra.mxu0 0.0
        %360 = vmatprep.subr.mxu0 0.0
        %361 = vmatpush1.msra.mxu0 0.0
        %362 = vmatprep.subr.mxu0 0.0
        %363 = vmatpush1.msra.mxu0 0.0
        %364 = vmatprep.subr.mxu0 0.0
        %365 = vmatpush1.msra.mxu0 0.0
        %366 = vmatprep.subr.mxu0 0.0
        %367 = vmatpush1.msra.mxu0 0.0
        %368 = vmatprep.subr.mxu0 0.0
        %369 = vmatpush1.msra.mxu0 0.0
        %370 = vmatprep.subr.mxu0 0.0
        %371 = vmatpush1.msra.mxu0 %v349
        %372 = vmatprep.subr.mxu0 0.0
        %373 = vmatpush1.msra.mxu0 %v348
        %374 = vmatprep.subr.mxu0 0.0
        %375 = vmatpush1.msra.mxu0 %v347
        %376 = vmatprep.subr.mxu0 0.0
        %377 = vmatpush1.msra.mxu0 %v346
        %378 = vmatprep.subr.mxu0 0.0
        %379 = vmatpush1.msra.mxu0 %v345
        %380 = vmatprep.subr.mxu0 0.0
        %381 = vmatpush1.msra.mxu0 %v344
        %382 = vmatprep.subr.mxu0 0.0
        %383 = vmatpush1.msra.mxu0 %v343
        %384 = vmatprep.subr.mxu0 0.0
        %385 = vmatpush1.msra.mxu0 %v342
        %386 = vmatprep.subr.mxu0 0.0
        %387 = vmatpush2.msra.mxu0 0.0
        %388 = vmatprep.subr.mxu0 0.0
        %389 = vmatpush2.msra.mxu0 0.0
        %390 = vmatprep.subr.mxu0 0.0
        %391 = vmatpush2.msra.mxu0 0.0
        %392 = vmatprep.subr.mxu0 0.0
        %393 = vmatpush2.msra.mxu0 0.0
        %394 = vmatprep.subr.mxu0 0.0
        %395 = vmatpush2.msra.mxu0 0.0
        %396 = vmatprep.subr.mxu0 0.0
        %397 = vmatpush2.msra.mxu0 0.0
        %398 = vmatprep.subr.mxu0 0.0
        %399 = vmatpush2.msra.mxu0 0.0
        %400 = vmatprep.subr.mxu0 0.0
        %401 = vmatpush2.msra.mxu0 0.0
        %402 = vmatprep.subr.mxu0 0.0
        %403 = vmatpush2.msra.mxu0 0.0
        %404 = vmatprep.subr.mxu0 0.0
        %405 = vmatpush2.msra.mxu0 0.0
        %406 = vmatprep.subr.mxu0 0.0
        %407 = vmatpush2.msra.mxu0 0.0
        %408 = vmatprep.subr.mxu0 0.0
        %409 = vmatpush2.msra.mxu0 0.0
        %410 = vmatprep.subr.mxu0 0.0
        %411 = vmatpush2.msra.mxu0 0.0
        %412 = vmatprep.subr.mxu0 0.0
        %413 = vmatpush2.msra.mxu0 0.0
        %414 = vmatprep.subr.mxu0 0.0
        %415 = vmatpush2.msra.mxu0 0.0
        %416 = vmatprep.subr.mxu0 0.0
        %417 = vmatpush2.msra.mxu0 0.0
        %418 = vmatprep.mubr.f32.mxu0 0.0
        %419 = vmatmul.mubr.f32.gmra.mxu0 %v352
        %v420 = vpop.f32.mrf.mxu0
        %v421 = vadd.f32 0.0, %v420
        %v422 = vpop.f32.mrf.mxu0
        %423 = vdwg.mxu0
        %v425 = vsel %vm350, %v330, 0
        %427 = vmatprep.subr.mxu0 0.0
        %428 = vmatpush1.msra.mxu0 0.0
        %429 = vmatprep.subr.mxu0 0.0
        %430 = vmatpush1.msra.mxu0 0.0
        %431 = vmatprep.subr.mxu0 0.0
        %432 = vmatpush1.msra.mxu0 0.0
        %433 = vmatprep.subr.mxu0 0.0
        %434 = vmatpush1.msra.mxu0 0.0
        %435 = vmatprep.subr.mxu0 0.0
        %436 = vmatpush1.msra.mxu0 0.0
        %437 = vmatprep.subr.mxu0 0.0
        %438 = vmatpush1.msra.mxu0 0.0
        %439 = vmatprep.subr.mxu0 0.0
        %440 = vmatpush1.msra.mxu0 0.0
        %441 = vmatprep.subr.mxu0 0.0
        %442 = vmatpush1.msra.mxu0 0.0
        %443 = vmatprep.subr.mxu0 0.0
        %444 = vmatpush1.msra.mxu0 %v340
        %445 = vmatprep.subr.mxu0 0.0
        %446 = vmatpush1.msra.mxu0 %v339
        %447 = vmatprep.subr.mxu0 0.0
        %448 = vmatpush1.msra.mxu0 %v338
        %449 = vmatprep.subr.mxu0 0.0
        %450 = vmatpush1.msra.mxu0 %v337
        %451 = vmatprep.subr.mxu0 0.0
        %452 = vmatpush1.msra.mxu0 %v336
        %453 = vmatprep.subr.mxu0 0.0
        %454 = vmatpush1.msra.mxu0 %v335
        %455 = vmatprep.subr.mxu0 0.0
        %456 = vmatpush1.msra.mxu0 %v334
        %457 = vmatprep.subr.mxu0 0.0
        %458 = vmatpush1.msra.mxu0 %v333
        %459 = vmatprep.subr.mxu0 0.0
        %460 = vmatpush2.msra.mxu0 0.0
        %461 = vmatprep.subr.mxu0 0.0
        %462 = vmatpush2.msra.mxu0 0.0
        %463 = vmatprep.subr.mxu0 0.0
        %464 = vmatpush2.msra.mxu0 0.0
        %465 = vmatprep.subr.mxu0 0.0
        %466 = vmatpush2.msra.mxu0 0.0
        %467 = vmatprep.subr.mxu0 0.0
        %468 = vmatpush2.msra.mxu0 0.0
        %469 = vmatprep.subr.mxu0 0.0
        %470 = vmatpush2.msra.mxu0 0.0
        %471 = vmatprep.subr.mxu0 0.0
        %472 = vmatpush2.msra.mxu0 0.0
        %473 = vmatprep.subr.mxu0 0.0
        %474 = vmatpush2.msra.mxu0 0.0
        %475 = vmatprep.subr.mxu0 0.0
        %476 = vmatpush2.msra.mxu0 0.0
        %477 = vmatprep.subr.mxu0 0.0
        %478 = vmatpush2.msra.mxu0 0.0
        %479 = vmatprep.subr.mxu0 0.0
        %480 = vmatpush2.msra.mxu0 0.0
        %481 = vmatprep.subr.mxu0 0.0
        %482 = vmatpush2.msra.mxu0 0.0
        %483 = vmatprep.subr.mxu0 0.0
        %484 = vmatpush2.msra.mxu0 0.0
        %485 = vmatprep.subr.mxu0 0.0
        %486 = vmatpush2.msra.mxu0 0.0
        %487 = vmatprep.subr.mxu0 0.0
        %488 = vmatpush2.msra.mxu0 0.0
        %489 = vmatprep.subr.mxu0 0.0
        %490 = vmatpush2.msra.mxu0 0.0
        %491 = vmatprep.mubr.f32.mxu0 0.0
        %492 = vmatmul.mubr.f32.gmra.mxu0 %v425
        %v493 = vpop.f32.mrf.mxu0
        %v494 = vadd.f32 %v421, %v493
        %v495 = vpop.f32.mrf.mxu0
        %496 = vdwg.mxu0
        %s497 = scalar_lea.vmem %s1, 128
        %v498 = vld [vmem:[%s497] sm:$0xff]
        %v499 = vld [vmem:[%s497 + $0x8] sm:$0xff]
        %v500 = vld [vmem:[%s497 + $0x10] sm:$0xff]
        %v501 = vld [vmem:[%s497 + $0x18] sm:$0xff]
        %v502 = vld [vmem:[%s497 + $0x20] sm:$0xff]
        %v503 = vld [vmem:[%s497 + $0x28] sm:$0xff]
        %v504 = vld [vmem:[%s497 + $0x30] sm:$0xff]
        %v505 = vld [vmem:[%s497 + $0x38] sm:$0xff]
        %v506 = vrot.slane %v330, 1
        %v507 = vsel %vm350, %v506, 0
        %509 = vmatprep.subr.mxu0 0.0
        %510 = vmatpush1.msra.mxu0 0.0
        %511 = vmatprep.subr.mxu0 0.0
        %512 = vmatpush1.msra.mxu0 0.0
        %513 = vmatprep.subr.mxu0 0.0
        %514 = vmatpush1.msra.mxu0 0.0
        %515 = vmatprep.subr.mxu0 0.0
        %516 = vmatpush1.msra.mxu0 0.0
        %517 = vmatprep.subr.mxu0 0.0
        %518 = vmatpush1.msra.mxu0 0.0
        %519 = vmatprep.subr.mxu0 0.0
        %520 = vmatpush1.msra.mxu0 0.0
        %521 = vmatprep.subr.mxu0 0.0
        %522 = vmatpush1.msra.mxu0 0.0
        %523 = vmatprep.subr.mxu0 0.0
        %524 = vmatpush1.msra.mxu0 0.0
        %525 = vmatprep.subr.mxu0 0.0
        %526 = vmatpush1.msra.mxu0 %v505
        %527 = vmatprep.subr.mxu0 0.0
        %528 = vmatpush1.msra.mxu0 %v504
        %529 = vmatprep.subr.mxu0 0.0
        %530 = vmatpush1.msra.mxu0 %v503
        %531 = vmatprep.subr.mxu0 0.0
        %532 = vmatpush1.msra.mxu0 %v502
        %533 = vmatprep.subr.mxu0 0.0
        %534 = vmatpush1.msra.mxu0 %v501
        %535 = vmatprep.subr.mxu0 0.0
        %536 = vmatpush1.msra.mxu0 %v500
        %537 = vmatprep.subr.mxu0 0.0
        %538 = vmatpush1.msra.mxu0 %v499
        %539 = vmatprep.subr.mxu0 0.0
        %540 = vmatpush1.msra.mxu0 %v498
        %541 = vmatprep.subr.mxu0 0.0
        %542 = vmatpush2.msra.mxu0 0.0
        %543 = vmatprep.subr.mxu0 0.0
        %544 = vmatpush2.msra.mxu0 0.0
        %545 = vmatprep.subr.mxu0 0.0
        %546 = vmatpush2.msra.mxu0 0.0
        %547 = vmatprep.subr.mxu0 0.0
        %548 = vmatpush2.msra.mxu0 0.0
        %549 = vmatprep.subr.mxu0 0.0
        %550 = vmatpush2.msra.mxu0 0.0
        %551 = vmatprep.subr.mxu0 0.0
        %552 = vmatpush2.msra.mxu0 0.0
        %553 = vmatprep.subr.mxu0 0.0
        %554 = vmatpush2.msra.mxu0 0.0
        %555 = vmatprep.subr.mxu0 0.0
        %556 = vmatpush2.msra.mxu0 0.0
        %557 = vmatprep.subr.mxu0 0.0
        %558 = vmatpush2.msra.mxu0 0.0
        %559 = vmatprep.subr.mxu0 0.0
        %560 = vmatpush2.msra.mxu0 0.0
        %561 = vmatprep.subr.mxu0 0.0
        %562 = vmatpush2.msra.mxu0 0.0
        %563 = vmatprep.subr.mxu0 0.0
        %564 = vmatpush2.msra.mxu0 0.0
        %565 = vmatprep.subr.mxu0 0.0
        %566 = vmatpush2.msra.mxu0 0.0
        %567 = vmatprep.subr.mxu0 0.0
        %568 = vmatpush2.msra.mxu0 0.0
        %569 = vmatprep.subr.mxu0 0.0
        %570 = vmatpush2.msra.mxu0 0.0
        %571 = vmatprep.subr.mxu0 0.0
        %572 = vmatpush2.msra.mxu0 0.0
        %573 = vmatprep.mubr.f32.mxu0 0.0
        %574 = vmatmul.mubr.f32.gmra.mxu0 %v507
        %v575 = vpop.f32.mrf.mxu0
        %v576 = vadd.f32 0.0, %v575
        %v577 = vpop.f32.mrf.mxu0
        %578 = vdwg.mxu0
        %v579 = vadd.f32 %v494, %v576
        %v580 = vld [vmem:[%s2] sm:$0x1]
        %v582 = vlaneseq
        %v583 = vshrl.u32 %v582, 7
        %v584 = vsub.s32 0, %v583
        %v585 = vrot.slane %v580, %v584
        %v587 = vadd.f32 %v579, %v585
        %v588 = vmax.f32 %v587, 0.0
        %v589 = vld [vmem:[%s3] sm:$0xff]
        %v590 = vld [vmem:[%s3 + $0x8] sm:$0xff]
        %v591 = vld [vmem:[%s3 + $0x10] sm:$0xff]
        %v592 = vld [vmem:[%s3 + $0x18] sm:$0xff]
        %v593 = vld [vmem:[%s3 + $0x20] sm:$0xff]
        %v594 = vld [vmem:[%s3 + $0x28] sm:$0xff]
        %v595 = vld [vmem:[%s3 + $0x30] sm:$0xff]
        %v596 = vld [vmem:[%s3 + $0x38] sm:$0xff]
        %v597 = vld [vmem:[%s3 + $0x40] sm:$0xff]
        %v598 = vld [vmem:[%s3 + $0x48] sm:$0xff]
        %v599 = vld [vmem:[%s3 + $0x50] sm:$0xff]
        %v600 = vld [vmem:[%s3 + $0x58] sm:$0xff]
        %v601 = vld [vmem:[%s3 + $0x60] sm:$0xff]
        %v602 = vld [vmem:[%s3 + $0x68] sm:$0xff]
        %v603 = vld [vmem:[%s3 + $0x70] sm:$0xff]
        %v604 = vld [vmem:[%s3 + $0x78] sm:$0xff]
        %s605 = scalar_lea.vmem %s3, 128
        %v606 = vld [vmem:[%s605] sm:$0xff]
        %v607 = vld [vmem:[%s605 + $0x8] sm:$0xff]
        %v608 = vld [vmem:[%s605 + $0x10] sm:$0xff]
        %v609 = vld [vmem:[%s605 + $0x18] sm:$0xff]
        %v610 = vld [vmem:[%s605 + $0x20] sm:$0xff]
        %v611 = vld [vmem:[%s605 + $0x28] sm:$0xff]
        %v612 = vld [vmem:[%s605 + $0x30] sm:$0xff]
        %v613 = vld [vmem:[%s605 + $0x38] sm:$0xff]
        %v614 = vld [vmem:[%s605 + $0x40] sm:$0xff]
        %v615 = vld [vmem:[%s605 + $0x48] sm:$0xff]
        %v616 = vld [vmem:[%s605 + $0x50] sm:$0xff]
        %v617 = vld [vmem:[%s605 + $0x58] sm:$0xff]
        %v618 = vld [vmem:[%s605 + $0x60] sm:$0xff]
        %v619 = vld [vmem:[%s605 + $0x68] sm:$0xff]
        %v620 = vld [vmem:[%s605 + $0x70] sm:$0xff]
        %v621 = vld [vmem:[%s605 + $0x78] sm:$0xff]
        %v623 = vrot.slane %v588, 1
        %625 = vmatprep.subr.mxu0 0.0
        %626 = vmatpush1.msra.mxu0 %v621
        %627 = vmatprep.subr.mxu0 0.0
        %628 = vmatpush1.msra.mxu0 %v620
        %629 = vmatprep.subr.mxu0 0.0
        %630 = vmatpush1.msra.mxu0 %v619
        %631 = vmatprep.subr.mxu0 0.0
        %632 = vmatpush1.msra.mxu0 %v618
        %633 = vmatprep.subr.mxu0 0.0
        %634 = vmatpush1.msra.mxu0 %v617
        %635 = vmatprep.subr.mxu0 0.0
        %636 = vmatpush1.msra.mxu0 %v616
        %637 = vmatprep.subr.mxu0 0.0
        %638 = vmatpush1.msra.mxu0 %v615
        %639 = vmatprep.subr.mxu0 0.0
        %640 = vmatpush1.msra.mxu0 %v614
        %641 = vmatprep.subr.mxu0 0.0
        %642 = vmatpush1.msra.mxu0 %v613
        %643 = vmatprep.subr.mxu0 0.0
        %644 = vmatpush1.msra.mxu0 %v612
        %645 = vmatprep.subr.mxu0 0.0
        %646 = vmatpush1.msra.mxu0 %v611
        %647 = vmatprep.subr.mxu0 0.0
        %648 = vmatpush1.msra.mxu0 %v610
        %649 = vmatprep.subr.mxu0 0.0
        %650 = vmatpush1.msra.mxu0 %v609
        %651 = vmatprep.subr.mxu0 0.0
        %652 = vmatpush1.msra.mxu0 %v608
        %653 = vmatprep.subr.mxu0 0.0
        %654 = vmatpush1.msra.mxu0 %v607
        %655 = vmatprep.subr.mxu0 0.0
        %656 = vmatpush1.msra.mxu0 %v606
        %657 = vmatprep.subr.mxu0 0.0
        %658 = vmatpush2.msra.mxu0 0.0
        %659 = vmatprep.subr.mxu0 0.0
        %660 = vmatpush2.msra.mxu0 0.0
        %661 = vmatprep.subr.mxu0 0.0
        %662 = vmatpush2.msra.mxu0 0.0
        %663 = vmatprep.subr.mxu0 0.0
        %664 = vmatpush2.msra.mxu0 0.0
        %665 = vmatprep.subr.mxu0 0.0
        %666 = vmatpush2.msra.mxu0 0.0
        %667 = vmatprep.subr.mxu0 0.0
        %668 = vmatpush2.msra.mxu0 0.0
        %669 = vmatprep.subr.mxu0 0.0
        %670 = vmatpush2.msra.mxu0 0.0
        %671 = vmatprep.subr.mxu0 0.0
        %672 = vmatpush2.msra.mxu0 0.0
        %673 = vmatprep.subr.mxu0 0.0
        %674 = vmatpush2.msra.mxu0 0.0
        %675 = vmatprep.subr.mxu0 0.0
        %676 = vmatpush2.msra.mxu0 0.0
        %677 = vmatprep.subr.mxu0 0.0
        %678 = vmatpush2.msra.mxu0 0.0
        %679 = vmatprep.subr.mxu0 0.0
        %680 = vmatpush2.msra.mxu0 0.0
        %681 = vmatprep.subr.mxu0 0.0
        %682 = vmatpush2.msra.mxu0 0.0
        %683 = vmatprep.subr.mxu0 0.0
        %684 = vmatpush2.msra.mxu0 0.0
        %685 = vmatprep.subr.mxu0 0.0
        %686 = vmatpush2.msra.mxu0 0.0
        %687 = vmatprep.subr.mxu0 0.0
        %688 = vmatpush2.msra.mxu0 0.0
        %689 = vmatprep.mubr.f32.mxu0 0.0
        %690 = vmatmul.mubr.f32.gmra.mxu0 %v623
        %v691 = vpop.f32.mrf.mxu0
        %v692 = vadd.f32 0.0, %v691
        %v693 = vpop.f32.mrf.mxu0
        %694 = vdwg.mxu0
        %695 = vmatprep.subr.mxu0 0.0
        %696 = vmatpush1.msra.mxu0 %v604
        %697 = vmatprep.subr.mxu0 0.0
        %698 = vmatpush1.msra.mxu0 %v603
        %699 = vmatprep.subr.mxu0 0.0
        %700 = vmatpush1.msra.mxu0 %v602
        %701 = vmatprep.subr.mxu0 0.0
        %702 = vmatpush1.msra.mxu0 %v601
        %703 = vmatprep.subr.mxu0 0.0
        %704 = vmatpush1.msra.mxu0 %v600
        %705 = vmatprep.subr.mxu0 0.0
        %706 = vmatpush1.msra.mxu0 %v599
        %707 = vmatprep.subr.mxu0 0.0
        %708 = vmatpush1.msra.mxu0 %v598
        %709 = vmatprep.subr.mxu0 0.0
        %710 = vmatpush1.msra.mxu0 %v597
        %711 = vmatprep.subr.mxu0 0.0
        %712 = vmatpush1.msra.mxu0 %v596
        %713 = vmatprep.subr.mxu0 0.0
        %714 = vmatpush1.msra.mxu0 %v595
        %715 = vmatprep.subr.mxu0 0.0
        %716 = vmatpush1.msra.mxu0 %v594
        %717 = vmatprep.subr.mxu0 0.0
        %718 = vmatpush1.msra.mxu0 %v593
        %719 = vmatprep.subr.mxu0 0.0
        %720 = vmatpush1.msra.mxu0 %v592
        %721 = vmatprep.subr.mxu0 0.0
        %722 = vmatpush1.msra.mxu0 %v591
        %723 = vmatprep.subr.mxu0 0.0
        %724 = vmatpush1.msra.mxu0 %v590
        %725 = vmatprep.subr.mxu0 0.0
        %726 = vmatpush1.msra.mxu0 %v589
        %727 = vmatprep.subr.mxu0 0.0
        %728 = vmatpush2.msra.mxu0 0.0
        %729 = vmatprep.subr.mxu0 0.0
        %730 = vmatpush2.msra.mxu0 0.0
        %731 = vmatprep.subr.mxu0 0.0
        %732 = vmatpush2.msra.mxu0 0.0
        %733 = vmatprep.subr.mxu0 0.0
        %734 = vmatpush2.msra.mxu0 0.0
        %735 = vmatprep.subr.mxu0 0.0
        %736 = vmatpush2.msra.mxu0 0.0
        %737 = vmatprep.subr.mxu0 0.0
        %738 = vmatpush2.msra.mxu0 0.0
        %739 = vmatprep.subr.mxu0 0.0
        %740 = vmatpush2.msra.mxu0 0.0
        %741 = vmatprep.subr.mxu0 0.0
        %742 = vmatpush2.msra.mxu0 0.0
        %743 = vmatprep.subr.mxu0 0.0
        %744 = vmatpush2.msra.mxu0 0.0
        %745 = vmatprep.subr.mxu0 0.0
        %746 = vmatpush2.msra.mxu0 0.0
        %747 = vmatprep.subr.mxu0 0.0
        %748 = vmatpush2.msra.mxu0 0.0
        %749 = vmatprep.subr.mxu0 0.0
        %750 = vmatpush2.msra.mxu0 0.0
        %751 = vmatprep.subr.mxu0 0.0
        %752 = vmatpush2.msra.mxu0 0.0
        %753 = vmatprep.subr.mxu0 0.0
        %754 = vmatpush2.msra.mxu0 0.0
        %755 = vmatprep.subr.mxu0 0.0
        %756 = vmatpush2.msra.mxu0 0.0
        %757 = vmatprep.subr.mxu0 0.0
        %758 = vmatpush2.msra.mxu0 0.0
        %759 = vmatprep.mubr.f32.mxu0 0.0
        %760 = vmatmul.mubr.f32.gmra.mxu0 %v588
        %v761 = vpop.f32.mrf.mxu0
        %v762 = vadd.f32 %v692, %v761
        %v763 = vpop.f32.mrf.mxu0
        %764 = vdwg.mxu0
        %s765 = scalar_lea.vmem %s3, 256
        %v766 = vld [vmem:[%s765] sm:$0xff]
        %v767 = vld [vmem:[%s765 + $0x8] sm:$0xff]
        %v768 = vld [vmem:[%s765 + $0x10] sm:$0xff]
        %v769 = vld [vmem:[%s765 + $0x18] sm:$0xff]
        %v770 = vld [vmem:[%s765 + $0x20] sm:$0xff]
        %v771 = vld [vmem:[%s765 + $0x28] sm:$0xff]
        %v772 = vld [vmem:[%s765 + $0x30] sm:$0xff]
        %v773 = vld [vmem:[%s765 + $0x38] sm:$0xff]
        %v774 = vld [vmem:[%s765 + $0x40] sm:$0xff]
        %v775 = vld [vmem:[%s765 + $0x48] sm:$0xff]
        %v776 = vld [vmem:[%s765 + $0x50] sm:$0xff]
        %v777 = vld [vmem:[%s765 + $0x58] sm:$0xff]
        %v778 = vld [vmem:[%s765 + $0x60] sm:$0xff]
        %v779 = vld [vmem:[%s765 + $0x68] sm:$0xff]
        %v780 = vld [vmem:[%s765 + $0x70] sm:$0xff]
        %v781 = vld [vmem:[%s765 + $0x78] sm:$0xff]
        %v782 = vrot.slane %v588, 2
        %784 = vmatprep.subr.mxu0 0.0
        %785 = vmatpush1.msra.mxu0 %v781
        %786 = vmatprep.subr.mxu0 0.0
        %787 = vmatpush1.msra.mxu0 %v780
        %788 = vmatprep.subr.mxu0 0.0
        %789 = vmatpush1.msra.mxu0 %v779
        %790 = vmatprep.subr.mxu0 0.0
        %791 = vmatpush1.msra.mxu0 %v778
        %792 = vmatprep.subr.mxu0 0.0
        %793 = vmatpush1.msra.mxu0 %v777
        %794 = vmatprep.subr.mxu0 0.0
        %795 = vmatpush1.msra.mxu0 %v776
        %796 = vmatprep.subr.mxu0 0.0
        %797 = vmatpush1.msra.mxu0 %v775
        %798 = vmatprep.subr.mxu0 0.0
        %799 = vmatpush1.msra.mxu0 %v774
        %800 = vmatprep.subr.mxu0 0.0
        %801 = vmatpush1.msra.mxu0 %v773
        %802 = vmatprep.subr.mxu0 0.0
        %803 = vmatpush1.msra.mxu0 %v772
        %804 = vmatprep.subr.mxu0 0.0
        %805 = vmatpush1.msra.mxu0 %v771
        %806 = vmatprep.subr.mxu0 0.0
        %807 = vmatpush1.msra.mxu0 %v770
        %808 = vmatprep.subr.mxu0 0.0
        %809 = vmatpush1.msra.mxu0 %v769
        %810 = vmatprep.subr.mxu0 0.0
        %811 = vmatpush1.msra.mxu0 %v768
        %812 = vmatprep.subr.mxu0 0.0
        %813 = vmatpush1.msra.mxu0 %v767
        %814 = vmatprep.subr.mxu0 0.0
        %815 = vmatpush1.msra.mxu0 %v766
        %816 = vmatprep.subr.mxu0 0.0
        %817 = vmatpush2.msra.mxu0 0.0
        %818 = vmatprep.subr.mxu0 0.0
        %819 = vmatpush2.msra.mxu0 0.0
        %820 = vmatprep.subr.mxu0 0.0
        %821 = vmatpush2.msra.mxu0 0.0
        %822 = vmatprep.subr.mxu0 0.0
        %823 = vmatpush2.msra.mxu0 0.0
        %824 = vmatprep.subr.mxu0 0.0
        %825 = vmatpush2.msra.mxu0 0.0
        %826 = vmatprep.subr.mxu0 0.0
        %827 = vmatpush2.msra.mxu0 0.0
        %828 = vmatprep.subr.mxu0 0.0
        %829 = vmatpush2.msra.mxu0 0.0
        %830 = vmatprep.subr.mxu0 0.0
        %831 = vmatpush2.msra.mxu0 0.0
        %832 = vmatprep.subr.mxu0 0.0
        %833 = vmatpush2.msra.mxu0 0.0
        %834 = vmatprep.subr.mxu0 0.0
        %835 = vmatpush2.msra.mxu0 0.0
        %836 = vmatprep.subr.mxu0 0.0
        %837 = vmatpush2.msra.mxu0 0.0
        %838 = vmatprep.subr.mxu0 0.0
        %839 = vmatpush2.msra.mxu0 0.0
        %840 = vmatprep.subr.mxu0 0.0
        %841 = vmatpush2.msra.mxu0 0.0
        %842 = vmatprep.subr.mxu0 0.0
        %843 = vmatpush2.msra.mxu0 0.0
        %844 = vmatprep.subr.mxu0 0.0
        %845 = vmatpush2.msra.mxu0 0.0
        %846 = vmatprep.subr.mxu0 0.0
        %847 = vmatpush2.msra.mxu0 0.0
        %848 = vmatprep.mubr.f32.mxu0 0.0
        %849 = vmatmul.mubr.f32.gmra.mxu0 %v782
        %v850 = vpop.f32.mrf.mxu0
        %v851 = vadd.f32 0.0, %v850
        %v852 = vpop.f32.mrf.mxu0
        %853 = vdwg.mxu0
        %v854 = vadd.f32 %v762, %v851
        %v855 = vld [vmem:[%s4] sm:$0x1]
        %v857 = vlaneseq
        %v858 = vshrl.u32 %v857, 7
        %v859 = vsub.s32 0, %v858
        %v860 = vrot.slane %v855, %v859
        %v862 = vadd.f32 %v854, %v860
        %v863 = vmax.f32 %v862, 0.0
        %v864 = vld [vmem:[%s6] sm:$0x1]
        %v865 = vld [vmem:[%s5] sm:$0xff]
        %v866 = vld [vmem:[%s5 + $0x8] sm:$0xff]
        %v867 = vld [vmem:[%s5 + $0x10] sm:$0xff]
        %v868 = vld [vmem:[%s5 + $0x18] sm:$0xff]
        %v869 = vld [vmem:[%s5 + $0x20] sm:$0xff]
        %v870 = vld [vmem:[%s5 + $0x28] sm:$0xff]
        %v871 = vld [vmem:[%s5 + $0x30] sm:$0xff]
        %v872 = vld [vmem:[%s5 + $0x38] sm:$0xff]
        %v873 = vld [vmem:[%s5 + $0x40] sm:$0xff]
        %v874 = vld [vmem:[%s5 + $0x48] sm:$0xff]
        %v875 = vld [vmem:[%s5 + $0x50] sm:$0xff]
        %v876 = vld [vmem:[%s5 + $0x58] sm:$0xff]
        %v877 = vld [vmem:[%s5 + $0x60] sm:$0xff]
        %v878 = vld [vmem:[%s5 + $0x68] sm:$0xff]
        %v879 = vld [vmem:[%s5 + $0x70] sm:$0xff]
        %v880 = vld [vmem:[%s5 + $0x78] sm:$0xff]
        %881 = vmatprep.subr.mxu0 0.0
        %882 = vmatpush1.msra.mxu0 %v880
        %883 = vmatprep.subr.mxu0 0.0
        %884 = vmatpush1.msra.mxu0 %v879
        %885 = vmatprep.subr.mxu0 0.0
        %886 = vmatpush1.msra.mxu0 %v878
        %887 = vmatprep.subr.mxu0 0.0
        %888 = vmatpush1.msra.mxu0 %v877
        %889 = vmatprep.subr.mxu0 0.0
        %890 = vmatpush1.msra.mxu0 %v876
        %891 = vmatprep.subr.mxu0 0.0
        %892 = vmatpush1.msra.mxu0 %v875
        %893 = vmatprep.subr.mxu0 0.0
        %894 = vmatpush1.msra.mxu0 %v874
        %895 = vmatprep.subr.mxu0 0.0
        %896 = vmatpush1.msra.mxu0 %v873
        %897 = vmatprep.subr.mxu0 0.0
        %898 = vmatpush1.msra.mxu0 %v872
        %899 = vmatprep.subr.mxu0 0.0
        %900 = vmatpush1.msra.mxu0 %v871
        %901 = vmatprep.subr.mxu0 0.0
        %902 = vmatpush1.msra.mxu0 %v870
        %903 = vmatprep.subr.mxu0 0.0
        %904 = vmatpush1.msra.mxu0 %v869
        %905 = vmatprep.subr.mxu0 0.0
        %906 = vmatpush1.msra.mxu0 %v868
        %907 = vmatprep.subr.mxu0 0.0
        %908 = vmatpush1.msra.mxu0 %v867
        %909 = vmatprep.subr.mxu0 0.0
        %910 = vmatpush1.msra.mxu0 %v866
        %911 = vmatprep.subr.mxu0 0.0
        %912 = vmatpush1.msra.mxu0 %v865
        %913 = vmatprep.subr.mxu0 0.0
        %914 = vmatpush2.msra.mxu0 0.0
        %915 = vmatprep.subr.mxu0 0.0
        %916 = vmatpush2.msra.mxu0 0.0
        %917 = vmatprep.subr.mxu0 0.0
        %918 = vmatpush2.msra.mxu0 0.0
        %919 = vmatprep.subr.mxu0 0.0
        %920 = vmatpush2.msra.mxu0 0.0
        %921 = vmatprep.subr.mxu0 0.0
        %922 = vmatpush2.msra.mxu0 0.0
        %923 = vmatprep.subr.mxu0 0.0
        %924 = vmatpush2.msra.mxu0 0.0
        %925 = vmatprep.subr.mxu0 0.0
        %926 = vmatpush2.msra.mxu0 0.0
        %927 = vmatprep.subr.mxu0 0.0
        %928 = vmatpush2.msra.mxu0 0.0
        %929 = vmatprep.subr.mxu0 0.0
        %930 = vmatpush2.msra.mxu0 0.0
        %931 = vmatprep.subr.mxu0 0.0
        %932 = vmatpush2.msra.mxu0 0.0
        %933 = vmatprep.subr.mxu0 0.0
        %934 = vmatpush2.msra.mxu0 0.0
        %935 = vmatprep.subr.mxu0 0.0
        %936 = vmatpush2.msra.mxu0 0.0
        %937 = vmatprep.subr.mxu0 0.0
        %938 = vmatpush2.msra.mxu0 0.0
        %939 = vmatprep.subr.mxu0 0.0
        %940 = vmatpush2.msra.mxu0 0.0
        %941 = vmatprep.subr.mxu0 0.0
        %942 = vmatpush2.msra.mxu0 0.0
        %943 = vmatprep.subr.mxu0 0.0
        %944 = vmatpush2.msra.mxu0 0.0
        %945 = vmatprep.mubr.f32.mxu0 0.0
        %946 = vmatmul.mubr.f32.gmra.mxu0 %v863
        %v947 = vpop.f32.mrf.mxu0
        %v948 = vadd.f32 0.0, %v947
        %v949 = vpop.f32.mrf.mxu0
        %950 = vdwg.mxu0
        %v951 = vadd.f32 %v864, %v948
        %s952 = scalar_lea.vmem %s5, 128
        %v953 = vld [vmem:[%s952] sm:$0xff]
        %v954 = vld [vmem:[%s952 + $0x8] sm:$0xff]
        %v955 = vld [vmem:[%s952 + $0x10] sm:$0xff]
        %v956 = vld [vmem:[%s952 + $0x18] sm:$0xff]
        %v957 = vld [vmem:[%s952 + $0x20] sm:$0xff]
        %v958 = vld [vmem:[%s952 + $0x28] sm:$0xff]
        %v959 = vld [vmem:[%s952 + $0x30] sm:$0xff]
        %v960 = vld [vmem:[%s952 + $0x38] sm:$0xff]
        %v961 = vld [vmem:[%s952 + $0x40] sm:$0xff]
        %v962 = vld [vmem:[%s952 + $0x48] sm:$0xff]
        %v963 = vld [vmem:[%s952 + $0x50] sm:$0xff]
        %v964 = vld [vmem:[%s952 + $0x58] sm:$0xff]
        %v965 = vld [vmem:[%s952 + $0x60] sm:$0xff]
        %v966 = vld [vmem:[%s952 + $0x68] sm:$0xff]
        %v967 = vld [vmem:[%s952 + $0x70] sm:$0xff]
        %v968 = vld [vmem:[%s952 + $0x78] sm:$0xff]
        %v970 = vrot.slane %v863, 1
        %972 = vmatprep.subr.mxu0 0.0
        %973 = vmatpush1.msra.mxu0 %v968
        %974 = vmatprep.subr.mxu0 0.0
        %975 = vmatpush1.msra.mxu0 %v967
        %976 = vmatprep.subr.mxu0 0.0
        %977 = vmatpush1.msra.mxu0 %v966
        %978 = vmatprep.subr.mxu0 0.0
        %979 = vmatpush1.msra.mxu0 %v965
        %980 = vmatprep.subr.mxu0 0.0
        %981 = vmatpush1.msra.mxu0 %v964
        %982 = vmatprep.subr.mxu0 0.0
        %983 = vmatpush1.msra.mxu0 %v963
        %984 = vmatprep.subr.mxu0 0.0
        %985 = vmatpush1.msra.mxu0 %v962
        %986 = vmatprep.subr.mxu0 0.0
        %987 = vmatpush1.msra.mxu0 %v961
        %988 = vmatprep.subr.mxu0 0.0
        %989 = vmatpush1.msra.mxu0 %v960
        %990 = vmatprep.subr.mxu0 0.0
        %991 = vmatpush1.msra.mxu0 %v959
        %992 = vmatprep.subr.mxu0 0.0
        %993 = vmatpush1.msra.mxu0 %v958
        %994 = vmatprep.subr.mxu0 0.0
        %995 = vmatpush1.msra.mxu0 %v957
        %996 = vmatprep.subr.mxu0 0.0
        %997 = vmatpush1.msra.mxu0 %v956
        %998 = vmatprep.subr.mxu0 0.0
        %999 = vmatpush1.msra.mxu0 %v955
        %1000 = vmatprep.subr.mxu0 0.0
        %1001 = vmatpush1.msra.mxu0 %v954
        %1002 = vmatprep.subr.mxu0 0.0
        %1003 = vmatpush1.msra.mxu0 %v953
        %1004 = vmatprep.subr.mxu0 0.0
        %1005 = vmatpush2.msra.mxu0 0.0
        %1006 = vmatprep.subr.mxu0 0.0
        %1007 = vmatpush2.msra.mxu0 0.0
        %1008 = vmatprep.subr.mxu0 0.0
        %1009 = vmatpush2.msra.mxu0 0.0
        %1010 = vmatprep.subr.mxu0 0.0
        %1011 = vmatpush2.msra.mxu0 0.0
        %1012 = vmatprep.subr.mxu0 0.0
        %1013 = vmatpush2.msra.mxu0 0.0
        %1014 = vmatprep.subr.mxu0 0.0
        %1015 = vmatpush2.msra.mxu0 0.0
        %1016 = vmatprep.subr.mxu0 0.0
        %1017 = vmatpush2.msra.mxu0 0.0
        %1018 = vmatprep.subr.mxu0 0.0
        %1019 = vmatpush2.msra.mxu0 0.0
        %1020 = vmatprep.subr.mxu0 0.0
        %1021 = vmatpush2.msra.mxu0 0.0
        %1022 = vmatprep.subr.mxu0 0.0
        %1023 = vmatpush2.msra.mxu0 0.0
        %1024 = vmatprep.subr.mxu0 0.0
        %1025 = vmatpush2.msra.mxu0 0.0
        %1026 = vmatprep.subr.mxu0 0.0
        %1027 = vmatpush2.msra.mxu0 0.0
        %1028 = vmatprep.subr.mxu0 0.0
        %1029 = vmatpush2.msra.mxu0 0.0
        %1030 = vmatprep.subr.mxu0 0.0
        %1031 = vmatpush2.msra.mxu0 0.0
        %1032 = vmatprep.subr.mxu0 0.0
        %1033 = vmatpush2.msra.mxu0 0.0
        %1034 = vmatprep.subr.mxu0 0.0
        %1035 = vmatpush2.msra.mxu0 0.0
        %1036 = vmatprep.mubr.f32.mxu0 0.0
        %1037 = vmatmul.mubr.f32.gmra.mxu0 %v970
        %v1038 = vpop.f32.mrf.mxu0
        %v1039 = vadd.f32 0.0, %v1038
        %v1040 = vpop.f32.mrf.mxu0
        %1041 = vdwg.mxu0
        %v1042 = vadd.f32 %v951, %v1039
        %s1043 = scalar_lea.vmem %s5, 256
        %v1044 = vld [vmem:[%s1043] sm:$0xff]
        %v1045 = vld [vmem:[%s1043 + $0x8] sm:$0xff]
        %v1046 = vld [vmem:[%s1043 + $0x10] sm:$0xff]
        %v1047 = vld [vmem:[%s1043 + $0x18] sm:$0xff]
        %v1048 = vld [vmem:[%s1043 + $0x20] sm:$0xff]
        %v1049 = vld [vmem:[%s1043 + $0x28] sm:$0xff]
        %v1050 = vld [vmem:[%s1043 + $0x30] sm:$0xff]
        %v1051 = vld [vmem:[%s1043 + $0x38] sm:$0xff]
        %v1052 = vld [vmem:[%s1043 + $0x40] sm:$0xff]
        %v1053 = vld [vmem:[%s1043 + $0x48] sm:$0xff]
        %v1054 = vld [vmem:[%s1043 + $0x50] sm:$0xff]
        %v1055 = vld [vmem:[%s1043 + $0x58] sm:$0xff]
        %v1056 = vld [vmem:[%s1043 + $0x60] sm:$0xff]
        %v1057 = vld [vmem:[%s1043 + $0x68] sm:$0xff]
        %v1058 = vld [vmem:[%s1043 + $0x70] sm:$0xff]
        %v1059 = vld [vmem:[%s1043 + $0x78] sm:$0xff]
        %v1060 = vrot.slane %v863, 2
        %1062 = vmatprep.subr.mxu0 0.0
        %1063 = vmatpush1.msra.mxu0 %v1059
        %1064 = vmatprep.subr.mxu0 0.0
        %1065 = vmatpush1.msra.mxu0 %v1058
        %1066 = vmatprep.subr.mxu0 0.0
        %1067 = vmatpush1.msra.mxu0 %v1057
        %1068 = vmatprep.subr.mxu0 0.0
        %1069 = vmatpush1.msra.mxu0 %v1056
        %1070 = vmatprep.subr.mxu0 0.0
        %1071 = vmatpush1.msra.mxu0 %v1055
        %1072 = vmatprep.subr.mxu0 0.0
        %1073 = vmatpush1.msra.mxu0 %v1054
        %1074 = vmatprep.subr.mxu0 0.0
        %1075 = vmatpush1.msra.mxu0 %v1053
        %1076 = vmatprep.subr.mxu0 0.0
        %1077 = vmatpush1.msra.mxu0 %v1052
        %1078 = vmatprep.subr.mxu0 0.0
        %1079 = vmatpush1.msra.mxu0 %v1051
        %1080 = vmatprep.subr.mxu0 0.0
        %1081 = vmatpush1.msra.mxu0 %v1050
        %1082 = vmatprep.subr.mxu0 0.0
        %1083 = vmatpush1.msra.mxu0 %v1049
        %1084 = vmatprep.subr.mxu0 0.0
        %1085 = vmatpush1.msra.mxu0 %v1048
        %1086 = vmatprep.subr.mxu0 0.0
        %1087 = vmatpush1.msra.mxu0 %v1047
        %1088 = vmatprep.subr.mxu0 0.0
        %1089 = vmatpush1.msra.mxu0 %v1046
        %1090 = vmatprep.subr.mxu0 0.0
        %1091 = vmatpush1.msra.mxu0 %v1045
        %1092 = vmatprep.subr.mxu0 0.0
        %1093 = vmatpush1.msra.mxu0 %v1044
        %1094 = vmatprep.subr.mxu0 0.0
        %1095 = vmatpush2.msra.mxu0 0.0
        %1096 = vmatprep.subr.mxu0 0.0
        %1097 = vmatpush2.msra.mxu0 0.0
        %1098 = vmatprep.subr.mxu0 0.0
        %1099 = vmatpush2.msra.mxu0 0.0
        %1100 = vmatprep.subr.mxu0 0.0
        %1101 = vmatpush2.msra.mxu0 0.0
        %1102 = vmatprep.subr.mxu0 0.0
        %1103 = vmatpush2.msra.mxu0 0.0
        %1104 = vmatprep.subr.mxu0 0.0
        %1105 = vmatpush2.msra.mxu0 0.0
        %1106 = vmatprep.subr.mxu0 0.0
        %1107 = vmatpush2.msra.mxu0 0.0
        %1108 = vmatprep.subr.mxu0 0.0
        %1109 = vmatpush2.msra.mxu0 0.0
        %1110 = vmatprep.subr.mxu0 0.0
        %1111 = vmatpush2.msra.mxu0 0.0
        %1112 = vmatprep.subr.mxu0 0.0
        %1113 = vmatpush2.msra.mxu0 0.0
        %1114 = vmatprep.subr.mxu0 0.0
        %1115 = vmatpush2.msra.mxu0 0.0
        %1116 = vmatprep.subr.mxu0 0.0
        %1117 = vmatpush2.msra.mxu0 0.0
        %1118 = vmatprep.subr.mxu0 0.0
        %1119 = vmatpush2.msra.mxu0 0.0
        %1120 = vmatprep.subr.mxu0 0.0
        %1121 = vmatpush2.msra.mxu0 0.0
        %1122 = vmatprep.subr.mxu0 0.0
        %1123 = vmatpush2.msra.mxu0 0.0
        %1124 = vmatprep.subr.mxu0 0.0
        %1125 = vmatpush2.msra.mxu0 0.0
        %1126 = vmatprep.mubr.f32.mxu0 0.0
        %1127 = vmatmul.mubr.f32.gmra.mxu0 %v1060
        %v1128 = vpop.f32.mrf.mxu0
        %v1129 = vadd.f32 0.0, %v1128
        %v1130 = vpop.f32.mrf.mxu0
        %1131 = vdwg.mxu0
        %v1132 = vadd.f32 %v1042, %v1129
        %s1133 = scalar_lea.vmem %s5, 384
        %v1134 = vld [vmem:[%s1133] sm:$0xff]
        %v1135 = vld [vmem:[%s1133 + $0x8] sm:$0xff]
        %v1136 = vld [vmem:[%s1133 + $0x10] sm:$0xff]
        %v1137 = vld [vmem:[%s1133 + $0x18] sm:$0xff]
        %v1138 = vld [vmem:[%s1133 + $0x20] sm:$0xff]
        %v1139 = vld [vmem:[%s1133 + $0x28] sm:$0xff]
        %v1140 = vld [vmem:[%s1133 + $0x30] sm:$0xff]
        %v1141 = vld [vmem:[%s1133 + $0x38] sm:$0xff]
        %v1142 = vld [vmem:[%s1133 + $0x40] sm:$0xff]
        %v1143 = vld [vmem:[%s1133 + $0x48] sm:$0xff]
        %v1144 = vld [vmem:[%s1133 + $0x50] sm:$0xff]
        %v1145 = vld [vmem:[%s1133 + $0x58] sm:$0xff]
        %v1146 = vld [vmem:[%s1133 + $0x60] sm:$0xff]
        %v1147 = vld [vmem:[%s1133 + $0x68] sm:$0xff]
        %v1148 = vld [vmem:[%s1133 + $0x70] sm:$0xff]
        %v1149 = vld [vmem:[%s1133 + $0x78] sm:$0xff]
        %v1150 = vrot.slane %v863, 3
        %1152 = vmatprep.subr.mxu0 0.0
        %1153 = vmatpush1.msra.mxu0 %v1149
        %1154 = vmatprep.subr.mxu0 0.0
        %1155 = vmatpush1.msra.mxu0 %v1148
        %1156 = vmatprep.subr.mxu0 0.0
        %1157 = vmatpush1.msra.mxu0 %v1147
        %1158 = vmatprep.subr.mxu0 0.0
        %1159 = vmatpush1.msra.mxu0 %v1146
        %1160 = vmatprep.subr.mxu0 0.0
        %1161 = vmatpush1.msra.mxu0 %v1145
        %1162 = vmatprep.subr.mxu0 0.0
        %1163 = vmatpush1.msra.mxu0 %v1144
        %1164 = vmatprep.subr.mxu0 0.0
        %1165 = vmatpush1.msra.mxu0 %v1143
        %1166 = vmatprep.subr.mxu0 0.0
        %1167 = vmatpush1.msra.mxu0 %v1142
        %1168 = vmatprep.subr.mxu0 0.0
        %1169 = vmatpush1.msra.mxu0 %v1141
        %1170 = vmatprep.subr.mxu0 0.0
        %1171 = vmatpush1.msra.mxu0 %v1140
        %1172 = vmatprep.subr.mxu0 0.0
        %1173 = vmatpush1.msra.mxu0 %v1139
        %1174 = vmatprep.subr.mxu0 0.0
        %1175 = vmatpush1.msra.mxu0 %v1138
        %1176 = vmatprep.subr.mxu0 0.0
        %1177 = vmatpush1.msra.mxu0 %v1137
        %1178 = vmatprep.subr.mxu0 0.0
        %1179 = vmatpush1.msra.mxu0 %v1136
        %1180 = vmatprep.subr.mxu0 0.0
        %1181 = vmatpush1.msra.mxu0 %v1135
        %1182 = vmatprep.subr.mxu0 0.0
        %1183 = vmatpush1.msra.mxu0 %v1134
        %1184 = vmatprep.subr.mxu0 0.0
        %1185 = vmatpush2.msra.mxu0 0.0
        %1186 = vmatprep.subr.mxu0 0.0
        %1187 = vmatpush2.msra.mxu0 0.0
        %1188 = vmatprep.subr.mxu0 0.0
        %1189 = vmatpush2.msra.mxu0 0.0
        %1190 = vmatprep.subr.mxu0 0.0
        %1191 = vmatpush2.msra.mxu0 0.0
        %1192 = vmatprep.subr.mxu0 0.0
        %1193 = vmatpush2.msra.mxu0 0.0
        %1194 = vmatprep.subr.mxu0 0.0
        %1195 = vmatpush2.msra.mxu0 0.0
        %1196 = vmatprep.subr.mxu0 0.0
        %1197 = vmatpush2.msra.mxu0 0.0
        %1198 = vmatprep.subr.mxu0 0.0
        %1199 = vmatpush2.msra.mxu0 0.0
        %1200 = vmatprep.subr.mxu0 0.0
        %1201 = vmatpush2.msra.mxu0 0.0
        %1202 = vmatprep.subr.mxu0 0.0
        %1203 = vmatpush2.msra.mxu0 0.0
        %1204 = vmatprep.subr.mxu0 0.0
        %1205 = vmatpush2.msra.mxu0 0.0
        %1206 = vmatprep.subr.mxu0 0.0
        %1207 = vmatpush2.msra.mxu0 0.0
        %1208 = vmatprep.subr.mxu0 0.0
        %1209 = vmatpush2.msra.mxu0 0.0
        %1210 = vmatprep.subr.mxu0 0.0
        %1211 = vmatpush2.msra.mxu0 0.0
        %1212 = vmatprep.subr.mxu0 0.0
        %1213 = vmatpush2.msra.mxu0 0.0
        %1214 = vmatprep.subr.mxu0 0.0
        %1215 = vmatpush2.msra.mxu0 0.0
        %1216 = vmatprep.mubr.f32.mxu0 0.0
        %1217 = vmatmul.mubr.f32.gmra.mxu0 %v1150
        %v1218 = vpop.f32.mrf.mxu0
        %v1219 = vadd.f32 0.0, %v1218
        %v1220 = vpop.f32.mrf.mxu0
        %1221 = vdwg.mxu0
        %v1222 = vadd.f32 %v1132, %v1219
        %s1223 = scalar_lea.vmem %s5, 512
        %v1224 = vld [vmem:[%s1223] sm:$0xff]
        %v1225 = vld [vmem:[%s1223 + $0x8] sm:$0xff]
        %v1226 = vld [vmem:[%s1223 + $0x10] sm:$0xff]
        %v1227 = vld [vmem:[%s1223 + $0x18] sm:$0xff]
        %v1228 = vld [vmem:[%s1223 + $0x20] sm:$0xff]
        %v1229 = vld [vmem:[%s1223 + $0x28] sm:$0xff]
        %v1230 = vld [vmem:[%s1223 + $0x30] sm:$0xff]
        %v1231 = vld [vmem:[%s1223 + $0x38] sm:$0xff]
        %v1232 = vld [vmem:[%s1223 + $0x40] sm:$0xff]
        %v1233 = vld [vmem:[%s1223 + $0x48] sm:$0xff]
        %v1234 = vld [vmem:[%s1223 + $0x50] sm:$0xff]
        %v1235 = vld [vmem:[%s1223 + $0x58] sm:$0xff]
        %v1236 = vld [vmem:[%s1223 + $0x60] sm:$0xff]
        %v1237 = vld [vmem:[%s1223 + $0x68] sm:$0xff]
        %v1238 = vld [vmem:[%s1223 + $0x70] sm:$0xff]
        %v1239 = vld [vmem:[%s1223 + $0x78] sm:$0xff]
        %v1240 = vrot.slane %v863, 4
        %1242 = vmatprep.subr.mxu0 0.0
        %1243 = vmatpush1.msra.mxu0 %v1239
        %1244 = vmatprep.subr.mxu0 0.0
        %1245 = vmatpush1.msra.mxu0 %v1238
        %1246 = vmatprep.subr.mxu0 0.0
        %1247 = vmatpush1.msra.mxu0 %v1237
        %1248 = vmatprep.subr.mxu0 0.0
        %1249 = vmatpush1.msra.mxu0 %v1236
        %1250 = vmatprep.subr.mxu0 0.0
        %1251 = vmatpush1.msra.mxu0 %v1235
        %1252 = vmatprep.subr.mxu0 0.0
        %1253 = vmatpush1.msra.mxu0 %v1234
        %1254 = vmatprep.subr.mxu0 0.0
        %1255 = vmatpush1.msra.mxu0 %v1233
        %1256 = vmatprep.subr.mxu0 0.0
        %1257 = vmatpush1.msra.mxu0 %v1232
        %1258 = vmatprep.subr.mxu0 0.0
        %1259 = vmatpush1.msra.mxu0 %v1231
        %1260 = vmatprep.subr.mxu0 0.0
        %1261 = vmatpush1.msra.mxu0 %v1230
        %1262 = vmatprep.subr.mxu0 0.0
        %1263 = vmatpush1.msra.mxu0 %v1229
        %1264 = vmatprep.subr.mxu0 0.0
        %1265 = vmatpush1.msra.mxu0 %v1228
        %1266 = vmatprep.subr.mxu0 0.0
        %1267 = vmatpush1.msra.mxu0 %v1227
        %1268 = vmatprep.subr.mxu0 0.0
        %1269 = vmatpush1.msra.mxu0 %v1226
        %1270 = vmatprep.subr.mxu0 0.0
        %1271 = vmatpush1.msra.mxu0 %v1225
        %1272 = vmatprep.subr.mxu0 0.0
        %1273 = vmatpush1.msra.mxu0 %v1224
        %1274 = vmatprep.subr.mxu0 0.0
        %1275 = vmatpush2.msra.mxu0 0.0
        %1276 = vmatprep.subr.mxu0 0.0
        %1277 = vmatpush2.msra.mxu0 0.0
        %1278 = vmatprep.subr.mxu0 0.0
        %1279 = vmatpush2.msra.mxu0 0.0
        %1280 = vmatprep.subr.mxu0 0.0
        %1281 = vmatpush2.msra.mxu0 0.0
        %1282 = vmatprep.subr.mxu0 0.0
        %1283 = vmatpush2.msra.mxu0 0.0
        %1284 = vmatprep.subr.mxu0 0.0
        %1285 = vmatpush2.msra.mxu0 0.0
        %1286 = vmatprep.subr.mxu0 0.0
        %1287 = vmatpush2.msra.mxu0 0.0
        %1288 = vmatprep.subr.mxu0 0.0
        %1289 = vmatpush2.msra.mxu0 0.0
        %1290 = vmatprep.subr.mxu0 0.0
        %1291 = vmatpush2.msra.mxu0 0.0
        %1292 = vmatprep.subr.mxu0 0.0
        %1293 = vmatpush2.msra.mxu0 0.0
        %1294 = vmatprep.subr.mxu0 0.0
        %1295 = vmatpush2.msra.mxu0 0.0
        %1296 = vmatprep.subr.mxu0 0.0
        %1297 = vmatpush2.msra.mxu0 0.0
        %1298 = vmatprep.subr.mxu0 0.0
        %1299 = vmatpush2.msra.mxu0 0.0
        %1300 = vmatprep.subr.mxu0 0.0
        %1301 = vmatpush2.msra.mxu0 0.0
        %1302 = vmatprep.subr.mxu0 0.0
        %1303 = vmatpush2.msra.mxu0 0.0
        %1304 = vmatprep.subr.mxu0 0.0
        %1305 = vmatpush2.msra.mxu0 0.0
        %1306 = vmatprep.mubr.f32.mxu0 0.0
        %1307 = vmatmul.mubr.f32.gmra.mxu0 %v1240
        %v1308 = vpop.f32.mrf.mxu0
        %v1309 = vadd.f32 0.0, %v1308
        %v1310 = vpop.f32.mrf.mxu0
        %1311 = vdwg.mxu0
        %v1312 = vadd.f32 %v1222, %v1309
        %v1313 = vmax.f32 %v1312, 0.0
        %v1314 = vld [vmem:[%s7] sm:$0xff]
        %v1315 = vld [vmem:[%s7 + $0x8] sm:$0xff]
        %v1316 = vld [vmem:[%s7 + $0x10] sm:$0xff]
        %v1317 = vld [vmem:[%s7 + $0x18] sm:$0xff]
        %v1318 = vld [vmem:[%s7 + $0x20] sm:$0xff]
        %v1319 = vld [vmem:[%s7 + $0x28] sm:$0xff]
        %v1320 = vld [vmem:[%s7 + $0x30] sm:$0xff]
        %v1321 = vld [vmem:[%s7 + $0x38] sm:$0xff]
        %v1322 = vld [vmem:[%s7 + $0x40] sm:$0xff]
        %v1323 = vld [vmem:[%s7 + $0x48] sm:$0xff]
        %v1324 = vld [vmem:[%s7 + $0x50] sm:$0xff]
        %v1325 = vld [vmem:[%s7 + $0x58] sm:$0xff]
        %v1326 = vld [vmem:[%s7 + $0x60] sm:$0xff]
        %v1327 = vld [vmem:[%s7 + $0x68] sm:$0xff]
        %v1328 = vld [vmem:[%s7 + $0x70] sm:$0xff]
        %v1329 = vld [vmem:[%s7 + $0x78] sm:$0xff]
        %v1330 = vld [vmem:[%s8] sm:$0x1]
        %1331 = vmatprep.subr.mxu0 0.0
        %1332 = vmatpush1.msra.mxu0 %v1329
        %1333 = vmatprep.subr.mxu0 0.0
        %1334 = vmatpush1.msra.mxu0 %v1328
        %1335 = vmatprep.subr.mxu0 0.0
        %1336 = vmatpush1.msra.mxu0 %v1327
        %1337 = vmatprep.subr.mxu0 0.0
        %1338 = vmatpush1.msra.mxu0 %v1326
        %1339 = vmatprep.subr.mxu0 0.0
        %1340 = vmatpush1.msra.mxu0 %v1325
        %1341 = vmatprep.subr.mxu0 0.0
        %1342 = vmatpush1.msra.mxu0 %v1324
        %1343 = vmatprep.subr.mxu0 0.0
        %1344 = vmatpush1.msra.mxu0 %v1323
        %1345 = vmatprep.subr.mxu0 0.0
        %1346 = vmatpush1.msra.mxu0 %v1322
        %1347 = vmatprep.subr.mxu0 0.0
        %1348 = vmatpush1.msra.mxu0 %v1321
        %1349 = vmatprep.subr.mxu0 0.0
        %1350 = vmatpush1.msra.mxu0 %v1320
        %1351 = vmatprep.subr.mxu0 0.0
        %1352 = vmatpush1.msra.mxu0 %v1319
        %1353 = vmatprep.subr.mxu0 0.0
        %1354 = vmatpush1.msra.mxu0 %v1318
        %1355 = vmatprep.subr.mxu0 0.0
        %1356 = vmatpush1.msra.mxu0 %v1317
        %1357 = vmatprep.subr.mxu0 0.0
        %1358 = vmatpush1.msra.mxu0 %v1316
        %1359 = vmatprep.subr.mxu0 0.0
        %1360 = vmatpush1.msra.mxu0 %v1315
        %1361 = vmatprep.subr.mxu0 0.0
        %1362 = vmatpush1.msra.mxu0 %v1314
        %1363 = vmatprep.subr.mxu0 0.0
        %1364 = vmatpush2.msra.mxu0 0.0
        %1365 = vmatprep.subr.mxu0 0.0
        %1366 = vmatpush2.msra.mxu0 0.0
        %1367 = vmatprep.subr.mxu0 0.0
        %1368 = vmatpush2.msra.mxu0 0.0
        %1369 = vmatprep.subr.mxu0 0.0
        %1370 = vmatpush2.msra.mxu0 0.0
        %1371 = vmatprep.subr.mxu0 0.0
        %1372 = vmatpush2.msra.mxu0 0.0
        %1373 = vmatprep.subr.mxu0 0.0
        %1374 = vmatpush2.msra.mxu0 0.0
        %1375 = vmatprep.subr.mxu0 0.0
        %1376 = vmatpush2.msra.mxu0 0.0
        %1377 = vmatprep.subr.mxu0 0.0
        %1378 = vmatpush2.msra.mxu0 0.0
        %1379 = vmatprep.subr.mxu0 0.0
        %1380 = vmatpush2.msra.mxu0 0.0
        %1381 = vmatprep.subr.mxu0 0.0
        %1382 = vmatpush2.msra.mxu0 0.0
        %1383 = vmatprep.subr.mxu0 0.0
        %1384 = vmatpush2.msra.mxu0 0.0
        %1385 = vmatprep.subr.mxu0 0.0
        %1386 = vmatpush2.msra.mxu0 0.0
        %1387 = vmatprep.subr.mxu0 0.0
        %1388 = vmatpush2.msra.mxu0 0.0
        %1389 = vmatprep.subr.mxu0 0.0
        %1390 = vmatpush2.msra.mxu0 0.0
        %1391 = vmatprep.subr.mxu0 0.0
        %1392 = vmatpush2.msra.mxu0 0.0
        %1393 = vmatprep.subr.mxu0 0.0
        %1394 = vmatpush2.msra.mxu0 0.0
        %1395 = vmatprep.mubr.f32.mxu0 0.0
        %1396 = vmatmul.mubr.f32.gmra.mxu0 %v1313
        %v1397 = vpop.f32.mrf.mxu0
        %v1398 = vadd.f32 %v1330, %v1397
        %v1399 = vpop.f32.mrf.mxu0
        %1400 = vdwg.mxu0
        %v1401 = vtanh.pop %v1398
        %vm1402 = vcmask 40960
        %1403 = vst.msk [vmem:[%s324] sm:$0x1] %vm1402, %v1401
        %s1404 = sand.u32 %s225, 1
        %s1405 = scalar_lea.sflag [#allocation3], %s1404
        %s1406 = sand.u32 %s225, 1
        %s1407 = scalar_lea.vmem [#allocation2], %s1406
        // Predicated region
        $region57: #{convnet_forward.1} parent=55 // pred_check
          %p1408 = pneg %p235
        $region58: #{convnet_forward.1} parent=55 // pred_check_branch
          %1410 = sbr.rel (%p1408) target = $region60
        $region59: #{convnet_forward.1} parent=55 // pred_region
          %s1412 = ssub.s32 16, 16
          %1413 = vsyncadd %s1405, %s1412
          %s1414 = smul.addr %s23, 16
          %s1415 = scalar_lea.hbm %s9, %s1414
          %s1417 = sshll.u32 %s1407, 4
          %s1418 = int_to_ptr.vmem [resolvable:$true] %s1417
          %1420 = dma.vmem_to_hbm [thread:$0]  %s1418, 16, %s1415, %s1405
        $region60: #{convnet_forward.1} parent=55 // pred_fallthru
          _
      $region56: #{convnet_forward.1} parent=5 // pred_fallthru
        _
      %p1421 = scmp.le.s32.totalorder 2, %s18
      // Predicated region
      $region61: #{convnet_forward.1} parent=5 // pred_check
        %p1422 = pneg %p1421
      $region62: #{convnet_forward.1} parent=5 // pred_check_branch
        %1424 = sbr.rel (%p1422) target = $region64
      $region63: #{convnet_forward.1} parent=5 // pred_region
        %s1425 = ssub.s32 %s18, 2
        // Predicated region
        $region65: #{convnet_forward.1} parent=63 // pred_check
          %p1426 = pneg %p241
        $region66: #{convnet_forward.1} parent=63 // pred_check_branch
          %1428 = sbr.rel (%p1426) target = $region68
        $region67: #{convnet_forward.1} parent=63 // pred_region
          %s1429 = sand.u32 %s226, 1
          %s1430 = scalar_lea.sflag [#allocation3], %s1429
          %s1431 = sand.u32 %s226, 1
          %s1432 = scalar_lea.vmem [#allocation2], %s1431
          %1433 = dma.done %s1430, 16
        $region68: #{convnet_forward.1} parent=63 // pred_fallthru
          _
      $region64: #{convnet_forward.1} parent=5 // pred_fallthru
        _
    $region6: #{convnet_forward.1} parent=1 // loop_footer
      %s22 = sadd.s32 1, %s18
    $region7: #{convnet_forward.1} parent=1 // loop_footer_branch
      %17 = sbr.rel target = $region3
    $region8: #{convnet_forward.1} parent=1 // loop_exit
      _
    %1434 = vsyncpa [#allocation3], 1
    %s1435 = scalar_lea.sflag [#allocation3], 1
    %1436 = vsyncpa %s1435, 1

</llo_original>
